<compile_context>
chip_gen: v7x
topology: tpu7x:2x2x1
jax: 0.10.0
libtpu: 0.0.40
codegen_flags: <defaults>
</compile_context>

<pallas_src>
import jax
import jax.numpy as jnp
from jax.experimental import pallas as pl
from jax.experimental.pallas import tpu as pltpu

NEG_SLOPE = 0.01   # PyTorch LeakyReLU default negative_slope
LANE = 128
SUBLANE = 8


def _leaky_relu(x):
    return jnp.where(x > 0, x, NEG_SLOPE * x)


def _round_up(x, m):
    return ((x + m - 1) // m) * m


def _vmem_capacity_bytes():
    """Best-effort physical VMEM query; conservative 64 MiB (v7x) fallback."""
    try:
        info = pltpu.get_tpu_info()
        for attr in ("vmem_capacity_bytes", "vmem_size_bytes", "vmem_bytes"):
            v = getattr(info, attr, None)
            if v:
                return int(v)
    except Exception:
        pass
    return 64 * 1024 * 1024


# ------------------------------- fused kernel -------------------------------

def _fused_gnn_kernel(x_ref, gat_ref, sct_ref, eemb_ref, wn_ref, bn_ref,
                      pool_ref, w1_ref, b1_ref, w2_ref, b2_ref,
                      out_ref, h_ref, hbf_ref, aggr_ref):
    """Whole SimpleTreeModel forward.

    grid = (n_layers, n_edge_tiles), both sequential ("arbitrary").
    h_ref (f32), hbf_ref (bf16 shadow of h) and aggr_ref persist across the grid.
    """
    layer = pl.program_id(0)
    et = pl.program_id(1)
    n_layers = pl.num_programs(0)
    n_etiles = pl.num_programs(1)

    # Load (padded) node features into the persistent activation buffers once.
    @pl.when(jnp.logical_and(layer == 0, et == 0))
    def _():
        x = x_ref[...]
        h_ref[...] = x
        hbf_ref[...] = x.astype(jnp.bfloat16)

    # Zero the scatter-add accumulator at the start of each layer.
    @pl.when(et == 0)
    def _():
        aggr_ref[...] = jnp.zeros_like(aggr_ref)

    # ---- edge-tile body: gather -> message -> scatter-add (accumulate) ----
    gat = gat_ref[...].astype(jnp.bfloat16)     # int8 one-hot (0/1 exact) -> bf16
    sct = sct_ref[...].astype(jnp.bfloat16)
    # gather source-node rows for this edge tile: [tE, N] @ [N, D] (bf16 MXU, f32 acc)
    x_src = jnp.dot(gat, hbf_ref[...], preferred_element_type=jnp.float32)
    # GINEConv message: ReLU(x_j + Lin_edge(edge_attr)); Lin_edge precomputed host-side.
    msg = jnp.maximum(x_src + eemb_ref[0].astype(jnp.float32), 0.0)
    # scatter-add onto destination nodes: [N, tE] @ [tE, D]
    aggr_ref[...] += jnp.dot(sct, msg.astype(jnp.bfloat16),
                             preferred_element_type=jnp.float32)

    # ---- layer finalize: GINEConv nn (Linear) + backbone LeakyReLU (eps = 0) ----
    # Note: padded node rows become leaky_relu(bn); harmless because the one-hot
    # gather/pool operators never select padded rows.
    @pl.when(et == n_etiles - 1)
    def _():
        hn = jnp.dot((h_ref[...] + aggr_ref[...]).astype(jnp.bfloat16), wn_ref[0],
                     preferred_element_type=jnp.float32) + bn_ref[0]
        hn = _leaky_relu(hn)
        h_ref[...] = hn
        hbf_ref[...] = hn.astype(jnp.bfloat16)

    # ---- head: global_add_pool -> Linear -> LeakyReLU -> Linear (last grid step only) ----
    @pl.when(jnp.logical_and(layer == n_layers - 1, et == n_etiles - 1))
    def _():
        pooled = jnp.dot(pool_ref[...], hbf_ref[...],
                         preferred_element_type=jnp.float32)
        z = _leaky_relu(jnp.dot(pooled.astype(jnp.bfloat16), w1_ref[...],
                                preferred_element_type=jnp.float32) + b1_ref[...])
        out_ref[...] = jnp.dot(z.astype(jnp.bfloat16), w2_ref[...],
                               preferred_element_type=jnp.float32) + b2_ref[...]


# --------------------------------- wrapper ----------------------------------

def simple_tree_forward(params, x, src, dst, edge_attr, batch, n_graphs,
                        *, vmem_budget_bytes=None):
    backbone = params["backbone"]
    (w1, b1), (w2, b2) = params["head"]
    n_layers = len(backbone)

    n_nodes, din0 = x.shape
    n_edges = int(src.shape[0])
    hidden = backbone[0][2].shape[1]

    f32, bf16, i8 = jnp.float32, jnp.bfloat16, jnp.int8

    d = _round_up(max(hidden, din0), LANE)           # padded feature width (lane-dense)
    h1 = _round_up(w1.shape[1], LANE)                # padded head hidden
    d_out = w2.shape[1]
    d_out_pad = _round_up(d_out, LANE)               # lane-dense output store
    n_pad = _round_up(n_nodes, SUBLANE)
    g_pad = _round_up(n_graphs, SUBLANE)

    # ---- generation-aware VMEM sizing ----
    cap = _vmem_capacity_bytes()
    if vmem_budget_bytes is None:
        vmem_budget_bytes = (96 * 1024 * 1024 if cap >= 100 * 1024 * 1024
                             else 36 * 1024 * 1024)
    # keep the budget (and hence the compiler limit) consistent with physical VMEM
    vmem_budget_bytes = min(vmem_budget_bytes,
                            max(cap - 16 * 1024 * 1024, 16 * 1024 * 1024))

    # Constant-index inputs (x, pool, head weights/bias, output) are single-buffered;
    # layer/edge-indexed streams (wn, bn, gat, sct, eemb) are double-buffered.
    fixed = (n_pad * d * 4                           # x (f32)
             + n_pad * d * (4 + 2 + 4)               # h + hbf + aggr scratch
             + 2 * (d * d * 2 + d * 4)               # per-layer nn weight (bf16) / bias (f32)
             + g_pad * n_pad * 2                     # pool one-hot (bf16)
             + d * h1 * 2 + h1 * 4 + h1 * d_out_pad * 2 + d_out_pad * 4
             + g_pad * d_out_pad * 4)                # output

    def _tile_bytes(te):
        # gather + scatter one-hot tiles (int8) + edge-embedding tile (bf16), double buffered
        return 2 * (te * n_pad * 1 + n_pad * te * 1 + te * d * 2)

    e_full = _round_up(max(n_edges, 1), SUBLANE)
    if fixed + _tile_bytes(e_full) <= vmem_budget_bytes:
        te, e_pad = e_full, e_full                   # single tile: operators stay VMEM-resident
    else:
        # prefer >=256-wide edge tiles for the 256x256 MXU on v6e/v7x; 128 only as last resort
        te = 128
        for cand in (2048, 1024, 512, 256):
            if fixed + _tile_bytes(cand) <= vmem_budget_bytes:
                te = cand
                break
        e_pad = _round_up(n_edges, te)
    n_etiles = e_pad // te

    vmem_limit = int(min(max(cap - 8 * 1024 * 1024, 32 * 1024 * 1024),
                         max(fixed + _tile_bytes(te) + 8 * 1024 * 1024,
                             vmem_budget_bytes + 8 * 1024 * 1024)))

    # ---- build padded, lane-dense operands ----
    x_p = jnp.pad(x.astype(f32), ((0, n_pad - n_nodes), (0, d - din0)))
    gat = jnp.pad(jax.nn.one_hot(src, n_pad, dtype=i8),
                  ((0, e_pad - n_edges), (0, 0)))                        # [E_pad, N_pad] int8
    sct = jnp.pad(jax.nn.one_hot(dst, n_pad, dtype=i8).T,
                  ((0, 0), (0, e_pad - n_edges)))                        # [N_pad, E_pad] int8
    pool = jnp.pad(jax.nn.one_hot(batch, g_pad, dtype=bf16).T,
                   ((0, 0), (0, n_pad - n_nodes)))                       # [G_pad, N_pad] bf16

    eemb, wn_s, bn_s = [], [], []
    for (we, be, wn, bn) in backbone:
        emb = edge_attr.astype(f32) @ we + be                            # K=2 Linear, host-side
        eemb.append(jnp.pad(emb, ((0, e_pad - n_edges),
                                  (0, d - emb.shape[1]))).astype(bf16))
        wn_s.append(jnp.pad(wn, ((0, d - wn.shape[0]),
                                 (0, d - wn.shape[1]))).astype(bf16))
        bn_s.append(jnp.pad(bn, ((0, 0), (0, d - bn.shape[1]))))
    eemb = jnp.stack(eemb)                                               # [L, E_pad, D] bf16
    wn_s = jnp.stack(wn_s)                                               # [L, D, D]     bf16
    bn_s = jnp.stack(bn_s)                                               # [L, 1, D]     f32

    w1_p = jnp.pad(w1, ((0, d - w1.shape[0]), (0, h1 - w1.shape[1]))).astype(bf16)
    b1_p = jnp.pad(b1, ((0, 0), (0, h1 - b1.shape[1])))
    w2_p = jnp.pad(w2, ((0, h1 - w2.shape[0]), (0, d_out_pad - d_out))).astype(bf16)
    b2_p = jnp.pad(b2, ((0, 0), (0, d_out_pad - d_out)))

    flops = (n_layers * (4 * e_pad * n_pad * d + 2 * n_pad * d * d)
             + 2 * g_pad * n_pad * d + 2 * g_pad * d * h1 + 2 * g_pad * h1 * d_out_pad)
    bytes_accessed = (x_p.size * 4
                      + (gat.size + sct.size) * 1 * n_layers
                      + eemb.size * 2 + wn_s.size * 2 + bn_s.size * 4
                      + pool.size * 2
                      + w1_p.size * 2 + b1_p.size * 4 + w2_p.size * 2 + b2_p.size * 4
                      + g_pad * d_out_pad * 4)

    out = pl.pallas_call(
        _fused_gnn_kernel,
        out_shape=jax.ShapeDtypeStruct((g_pad, d_out_pad), f32),
        grid=(n_layers, n_etiles),
        in_specs=[
            pl.BlockSpec((n_pad, d), lambda l, e: (0, 0)),               # x
            pl.BlockSpec((te, n_pad), lambda l, e: (e, 0)),              # gather one-hot tile
            pl.BlockSpec((n_pad, te), lambda l, e: (0, e)),              # scatter one-hot tile
            pl.BlockSpec((1, te, d), lambda l, e: (l, e, 0)),            # edge embeddings tile
            pl.BlockSpec((1, d, d), lambda l, e: (l, 0, 0)),             # GINE nn weight
            pl.BlockSpec((1, 1, d), lambda l, e: (l, 0, 0)),             # GINE nn bias
            pl.BlockSpec((g_pad, n_pad), lambda l, e: (0, 0)),           # pool one-hot
            pl.BlockSpec((d, h1), lambda l, e: (0, 0)),                  # head w1
            pl.BlockSpec((1, h1), lambda l, e: (0, 0)),                  # head b1
            pl.BlockSpec((h1, d_out_pad), lambda l, e: (0, 0)),          # head w2
            pl.BlockSpec((1, d_out_pad), lambda l, e: (0, 0)),           # head b2
        ],
        out_specs=pl.BlockSpec((g_pad, d_out_pad), lambda l, e: (0, 0)),
        scratch_shapes=[
            pltpu.VMEM((n_pad, d), f32),     # h: node activations, resident across layers
            pltpu.VMEM((n_pad, d), bf16),    # bf16 shadow of h (refreshed per layer)
            pltpu.VMEM((n_pad, d), f32),     # aggr: scatter-add accumulator
        ],
        compiler_params=pltpu.CompilerParams(
            dimension_semantics=("arbitrary", "arbitrary"),
            vmem_limit_bytes=vmem_limit,
        ),
        cost_estimate=pl.CostEstimate(flops=int(flops), transcendentals=0,
                                      bytes_accessed=int(bytes_accessed)),
    )(x_p, gat, sct, eemb, wn_s, bn_s, pool, w1_p, b1_p, w2_p, b2_p)

    return out[:n_graphs, :d_out]


# ------------------------------ parameter init ------------------------------

def _linear_init(key, din, dout):
    k1, k2 = jax.random.split(key)
    bound = 1.0 / (din ** 0.5)
    w = jax.random.uniform(k1, (din, dout), jnp.float32, -bound, bound)
    b = jax.random.uniform(k2, (1, dout), jnp.float32, -bound, bound)
    return w, b


def init_params(key, input_dim, bb_hidden=128, bb_layers=3, head_hidden=256, out_dim=10):
    params = {"backbone": [], "head": []}
    for i in range(bb_layers):
        din = input_dim if i == 0 else bb_hidden
        key, k_e, k_n = jax.random.split(key, 3)
        we, be = _linear_init(k_e, 2, din)          # GINEConv edge lin: edge_dim(2) -> in_channels
        wn, bn = _linear_init(k_n, din, bb_hidden)  # GINEConv nn: Linear(din, hidden)
        params["backbone"].append((we, be, wn, bn))
    key, k1, k2 = jax.random.split(key, 3)
    params["head"].append(_linear_init(k1, bb_hidden, head_hidden))
    params["head"].append(_linear_init(k2, head_hidden, out_dim))
    return params


# --------------------------- reference (pure JAX) ----------------------------

def reference_forward(params, x, src, dst, edge_attr, batch, n_graphs):
    h = x
    for (we, be, wn, bn) in params["backbone"]:
        edge_emb = edge_attr @ we + be
        msg = jnp.maximum(h[src] + edge_emb, 0.0)
        aggr = jax.ops.segment_sum(msg, dst, num_segments=h.shape[0])
        h = _leaky_relu((h + aggr) @ wn + bn)
    pooled = jax.ops.segment_sum(h, batch, num_segments=n_graphs)
    (w1, b1), (w2, b2) = params["head"]
    h = _leaky_relu(pooled @ w1 + b1)
    return h @ w2 + b2


# ------------------------------- graph builder -------------------------------

# TODO(synk): Tree.state2pyg / Batch.from_data_list (state -> graph conversion) is pure
# host-side data construction with no Pallas equivalent; a synthetic batched tree graph
# (node features, edge_index, 2-dim edge_attr, batch vector) is built directly here.
def build_tree_batch(nodes_per_graph):
    src, dst, eattr, batch = [], [], [], []
    offset = 0
    for g, n in enumerate(nodes_per_graph):
        for i in range(1, n):
            p = (i - 1) // 2
            # parent -> child and child -> parent edges with 2-dim edge attributes
            src += [offset + p, offset + i]
            dst += [offset + i, offset + p]
            eattr += [[1.0, 0.0], [0.0, 1.0]]
        batch += [g] * n
        offset += n
    return (jnp.array(src, jnp.int32), jnp.array(dst, jnp.int32),
            jnp.array(eattr, jnp.float32), jnp.array(batch, jnp.int32))


if __name__ == "__main__":
    # SimpleTreeModel config (backbone/head defaults of the module)
    n_features = 5
    input_dim = n_features + 3          # synthetic node-feature width from state2pyg
    policy_output_dim = 10
    bb_hidden, bb_layers = 128, 3
    head_hidden = 256

    key = jax.random.PRNGKey(0)
    key, k_x = jax.random.split(key)

    nodes_per_graph = [5, 7]            # batch of 2 small trees
    src, dst, edge_attr, batch = build_tree_batch(nodes_per_graph)
    n_nodes = int(sum(nodes_per_graph))
    n_graphs = len(nodes_per_graph)

    x = jax.random.normal(k_x, (n_nodes, input_dim), jnp.float32)
    params = init_params(key, input_dim, bb_hidden, bb_layers,
                         head_hidden, policy_output_dim)

    out = simple_tree_forward(params, x, src, dst, edge_attr, batch, n_graphs)
    out = jax.block_until_ready(out)

    ref = reference_forward(params, x, src, dst, edge_attr, batch, n_graphs)
    assert out.shape == (n_graphs, policy_output_dim)
    # bf16 MXU inputs (data + weights) -> looser tolerance than pure-f32.
    max_err = float(jnp.max(jnp.abs(out - ref)))
    assert jnp.allclose(out, ref, atol=5e-2, rtol=5e-2), \
        f"Pallas output mismatch vs reference (max|err|={max_err:.3e})"

    print("KERNEL_OK")
</pallas_src>

<mosaic_0001>
module attributes {stable_mosaic.version = 11 : i64} {
  func.func @_fused_gnn_kernel(%arg0: i32, %arg1: i32, %arg2: memref<16x128xf32, #tpu.memory_space<vmem>>, %arg3: memref<24x16xi8, #tpu.memory_space<vmem>>, %arg4: memref<16x24xi8, #tpu.memory_space<vmem>>, %arg5: memref<1x24x128xbf16, #tpu.memory_space<vmem>>, %arg6: memref<1x128x128xbf16, #tpu.memory_space<vmem>>, %arg7: memref<1x1x128xf32, #tpu.memory_space<vmem>>, %arg8: memref<8x16xbf16, #tpu.memory_space<vmem>>, %arg9: memref<128x256xbf16, #tpu.memory_space<vmem>>, %arg10: memref<1x256xf32, #tpu.memory_space<vmem>>, %arg11: memref<256x128xbf16, #tpu.memory_space<vmem>>, %arg12: memref<1x128xf32, #tpu.memory_space<vmem>>, %arg13: memref<8x128xf32, #tpu.memory_space<vmem>>, %arg14: memref<16x128xf32, #tpu.memory_space<vmem>>, %arg15: memref<16x128xbf16, #tpu.memory_space<vmem>>, %arg16: memref<16x128xf32, #tpu.memory_space<vmem>>) attributes {dimension_semantics = [#tpu.dimension_semantics<arbitrary>, #tpu.dimension_semantics<arbitrary>], iteration_bounds = array<i64: 3, 1>, scalar_prefetch = 0 : i64, scratch_operands = 3 : i64, tpu.core_type = #tpu.core_type<tc>, window_params = [{pipeline_mode = #tpu.pipeline_mode<synchronous>, transform_indices = @transform_0, window_bounds = array<i64: 16, 128>}, {transform_indices = @transform_1, window_bounds = array<i64: 24, 16>}, {transform_indices = @transform_2, window_bounds = array<i64: 16, 24>}, {transform_indices = @transform_3, window_bounds = array<i64: 1, 24, 128>}, {transform_indices = @transform_4, window_bounds = array<i64: 1, 128, 128>}, {transform_indices = @transform_5, window_bounds = array<i64: 1, 1, 128>}, {pipeline_mode = #tpu.pipeline_mode<synchronous>, transform_indices = @transform_6, window_bounds = array<i64: 8, 16>}, {pipeline_mode = #tpu.pipeline_mode<synchronous>, transform_indices = @transform_7, window_bounds = array<i64: 128, 256>}, {pipeline_mode = #tpu.pipeline_mode<synchronous>, transform_indices = @transform_8, window_bounds = array<i64: 1, 256>}, {pipeline_mode = #tpu.pipeline_mode<synchronous>, transform_indices = @transform_9, window_bounds = array<i64: 256, 128>}, {pipeline_mode = #tpu.pipeline_mode<synchronous>, transform_indices = @transform_10, window_bounds = array<i64: 1, 128>}, {pipeline_mode = #tpu.pipeline_mode<synchronous>, transform_indices = @transform_11, window_bounds = array<i64: 8, 128>}]} {
    %c0_i32 = arith.constant 0 : i32
    %0 = arith.cmpi eq, %arg0, %c0_i32 : i32
    %c0_i32_0 = arith.constant 0 : i32
    %1 = arith.cmpi eq, %arg1, %c0_i32_0 : i32
    %2 = arith.andi %0, %1 : i1
    %3 = arith.extui %2 : i1 to i32
    %c0_i32_1 = arith.constant 0 : i32
    %4 = arith.cmpi ne, %3, %c0_i32_1 : i32
    scf.if %4 {
      %c0_22 = arith.constant 0 : index
      %c0_23 = arith.constant 0 : index
      %33 = vector.load %arg2[%c0_22, %c0_23] : memref<16x128xf32, #tpu.memory_space<vmem>>, vector<16x128xf32>
      %c0_24 = arith.constant 0 : index
      %c0_25 = arith.constant 0 : index
      %34 = vector.load %arg14[%c0_24, %c0_25] : memref<16x128xf32, #tpu.memory_space<vmem>>, vector<16x128xf32>
      tpu.vector_store %arg14[%c0_24, %c0_25], %33 {strides = array<i32>} : memref<16x128xf32, #tpu.memory_space<vmem>>, vector<16x128xf32>,
      %35 = arith.truncf %33 : vector<16x128xf32> to vector<16x128xbf16>
      %c0_26 = arith.constant 0 : index
      %c0_27 = arith.constant 0 : index
      %36 = vector.load %arg15[%c0_26, %c0_27] : memref<16x128xbf16, #tpu.memory_space<vmem>>, vector<16x128xbf16>
      tpu.vector_store %arg15[%c0_26, %c0_27], %35 {strides = array<i32>} : memref<16x128xbf16, #tpu.memory_space<vmem>>, vector<16x128xbf16>,
    } else {
    }
    %c0_i32_2 = arith.constant 0 : i32
    %5 = arith.cmpi eq, %arg1, %c0_i32_2 : i32
    %6 = arith.extui %5 : i1 to i32
    %c0_i32_3 = arith.constant 0 : i32
    %7 = arith.cmpi ne, %6, %c0_i32_3 : i32
    scf.if %7 {
      %cst_22 = arith.constant 0.000000e+00 : f32
      %33 = vector.broadcast %cst_22 : f32 to vector<16x128xf32>
      %c0_23 = arith.constant 0 : index
      %c0_24 = arith.constant 0 : index
      %34 = vector.load %arg16[%c0_23, %c0_24] : memref<16x128xf32, #tpu.memory_space<vmem>>, vector<16x128xf32>
      tpu.vector_store %arg16[%c0_23, %c0_24], %33 {strides = array<i32>} : memref<16x128xf32, #tpu.memory_space<vmem>>, vector<16x128xf32>,
    } else {
    }
    %c0 = arith.constant 0 : index
    %c0_4 = arith.constant 0 : index
    %8 = vector.load %arg3[%c0, %c0_4] : memref<24x16xi8, #tpu.memory_space<vmem>>, vector<24x16xi8>
    %9 = arith.sitofp %8 : vector<24x16xi8> to vector<24x16xbf16>
    %c0_5 = arith.constant 0 : index
    %c0_6 = arith.constant 0 : index
    %10 = vector.load %arg4[%c0_5, %c0_6] : memref<16x24xi8, #tpu.memory_space<vmem>>, vector<16x24xi8>
    %11 = arith.sitofp %10 : vector<16x24xi8> to vector<16x24xbf16>
    %c0_7 = arith.constant 0 : index
    %c0_8 = arith.constant 0 : index
    %12 = vector.load %arg15[%c0_7, %c0_8] : memref<16x128xbf16, #tpu.memory_space<vmem>>, vector<16x128xbf16>
    %cst = arith.constant dense<0.000000e+00> : vector<24x128xf32>
    %13 = tpu.matmul %9, %12, %cst {dimension_numbers = #tpu.dot_dimension_numbers<[1], [0], [0], [1], [0, 0, 1, 1], [], []>} : vector<24x16xbf16>, vector<16x128xbf16>, vector<24x128xf32> -> vector<24x128xf32>
    %c0_9 = arith.constant 0 : index
    %c0_10 = arith.constant 0 : index
    %c0_11 = arith.constant 0 : index
    %14 = vector.load %arg5[%c0_9, %c0_10, %c0_11] : memref<1x24x128xbf16, #tpu.memory_space<vmem>>, vector<1x24x128xbf16>
    %15 = vector.shape_cast %14 : vector<1x24x128xbf16> to vector<24x128xbf16>
    %16 = arith.extf %15 : vector<24x128xbf16> to vector<24x128xf32>
    %17 = arith.addf %13, %16 : vector<24x128xf32>
    %cst_12 = arith.constant 0.000000e+00 : f32
    %18 = vector.broadcast %cst_12 : f32 to vector<24x128xf32>
    %19 = arith.maximumf %17, %18 : vector<24x128xf32>
    %c0_13 = arith.constant 0 : index
    %c0_14 = arith.constant 0 : index
    %20 = vector.load %arg16[%c0_13, %c0_14] : memref<16x128xf32, #tpu.memory_space<vmem>>, vector<16x128xf32>
    %21 = arith.truncf %19 : vector<24x128xf32> to vector<24x128xbf16>
    %cst_15 = arith.constant dense<0.000000e+00> : vector<16x128xf32>
    %22 = tpu.matmul %11, %21, %cst_15 {dimension_numbers = #tpu.dot_dimension_numbers<[1], [0], [0], [1], [0, 0, 1, 1], [], []>} : vector<16x24xbf16>, vector<24x128xbf16>, vector<16x128xf32> -> vector<16x128xf32>
    %23 = arith.addf %20, %22 : vector<16x128xf32>
    %c0_16 = arith.constant 0 : index
    %c0_17 = arith.constant 0 : index
    %24 = vector.load %arg16[%c0_16, %c0_17] : memref<16x128xf32, #tpu.memory_space<vmem>>, vector<16x128xf32>
    tpu.vector_store %arg16[%c0_16, %c0_17], %23 {strides = array<i32>} : memref<16x128xf32, #tpu.memory_space<vmem>>, vector<16x128xf32>,
    %c0_i32_18 = arith.constant 0 : i32
    %25 = arith.cmpi eq, %arg1, %c0_i32_18 : i32
    %26 = arith.extui %25 : i1 to i32
    %c0_i32_19 = arith.constant 0 : i32
    %27 = arith.cmpi ne, %26, %c0_i32_19 : i32
    scf.if %27 {
      %c0_22 = arith.constant 0 : index
      %c0_23 = arith.constant 0 : index
      %33 = vector.load %arg14[%c0_22, %c0_23] : memref<16x128xf32, #tpu.memory_space<vmem>>, vector<16x128xf32>
      %c0_24 = arith.constant 0 : index
      %c0_25 = arith.constant 0 : index
      %34 = vector.load %arg16[%c0_24, %c0_25] : memref<16x128xf32, #tpu.memory_space<vmem>>, vector<16x128xf32>
      %35 = arith.addf %33, %34 : vector<16x128xf32>
      %36 = arith.truncf %35 : vector<16x128xf32> to vector<16x128xbf16>
      %c0_26 = arith.constant 0 : index
      %c0_27 = arith.constant 0 : index
      %c0_28 = arith.constant 0 : index
      %37 = vector.load %arg6[%c0_26, %c0_27, %c0_28] : memref<1x128x128xbf16, #tpu.memory_space<vmem>>, vector<1x128x128xbf16>
      %38 = vector.shape_cast %37 : vector<1x128x128xbf16> to vector<128x128xbf16>
      %cst_29 = arith.constant dense<0.000000e+00> : vector<16x128xf32>
      %39 = tpu.matmul %36, %38, %cst_29 {dimension_numbers = #tpu.dot_dimension_numbers<[1], [0], [0], [1], [0, 0, 1, 1], [], []>} : vector<16x128xbf16>, vector<128x128xbf16>, vector<16x128xf32> -> vector<16x128xf32>
      %c0_30 = arith.constant 0 : index
      %c0_31 = arith.constant 0 : index
      %c0_32 = arith.constant 0 : index
      %40 = vector.load %arg7[%c0_30, %c0_31, %c0_32] : memref<1x1x128xf32, #tpu.memory_space<vmem>>, vector<1x1x128xf32>
      %41 = vector.shape_cast %40 : vector<1x1x128xf32> to vector<1x128xf32>
      %42 = vector.broadcast %41 : vector<1x128xf32> to vector<16x128xf32>
      %43 = arith.addf %39, %42 : vector<16x128xf32>
      %cst_33 = arith.constant 0.000000e+00 : f32
      %44 = vector.broadcast %cst_33 : f32 to vector<16x128xf32>
      %45 = arith.cmpf ogt, %43, %44 : vector<16x128xf32>
      %cst_34 = arith.constant 0.00999999977 : f32
      %46 = vector.broadcast %cst_34 : f32 to vector<16x128xf32>
      %47 = arith.mulf %46, %43 : vector<16x128xf32>
      %48 = arith.select %45, %43, %47 : vector<16x128xi1>, vector<16x128xf32>
      %c0_35 = arith.constant 0 : index
      %c0_36 = arith.constant 0 : index
      %49 = vector.load %arg14[%c0_35, %c0_36] : memref<16x128xf32, #tpu.memory_space<vmem>>, vector<16x128xf32>
      tpu.vector_store %arg14[%c0_35, %c0_36], %48 {strides = array<i32>} : memref<16x128xf32, #tpu.memory_space<vmem>>, vector<16x128xf32>,
      %50 = arith.truncf %48 : vector<16x128xf32> to vector<16x128xbf16>
      %c0_37 = arith.constant 0 : index
      %c0_38 = arith.constant 0 : index
      %51 = vector.load %arg15[%c0_37, %c0_38] : memref<16x128xbf16, #tpu.memory_space<vmem>>, vector<16x128xbf16>
      tpu.vector_store %arg15[%c0_37, %c0_38], %50 {strides = array<i32>} : memref<16x128xbf16, #tpu.memory_space<vmem>>, vector<16x128xbf16>,
    } else {
    }
    %c2_i32 = arith.constant 2 : i32
    %28 = arith.cmpi eq, %arg0, %c2_i32 : i32
    %c0_i32_20 = arith.constant 0 : i32
    %29 = arith.cmpi eq, %arg1, %c0_i32_20 : i32
    %30 = arith.andi %28, %29 : i1
    %31 = arith.extui %30 : i1 to i32
    %c0_i32_21 = arith.constant 0 : i32
    %32 = arith.cmpi ne, %31, %c0_i32_21 : i32
    scf.if %32 {
      %c0_22 = arith.constant 0 : index
      %c0_23 = arith.constant 0 : index
      %33 = vector.load %arg8[%c0_22, %c0_23] : memref<8x16xbf16, #tpu.memory_space<vmem>>, vector<8x16xbf16>
      %c0_24 = arith.constant 0 : index
      %c0_25 = arith.constant 0 : index
      %34 = vector.load %arg15[%c0_24, %c0_25] : memref<16x128xbf16, #tpu.memory_space<vmem>>, vector<16x128xbf16>
      %cst_26 = arith.constant dense<0.000000e+00> : vector<8x128xf32>
      %35 = tpu.matmul %33, %34, %cst_26 {dimension_numbers = #tpu.dot_dimension_numbers<[1], [0], [0], [1], [0, 0, 1, 1], [], []>} : vector<8x16xbf16>, vector<16x128xbf16>, vector<8x128xf32> -> vector<8x128xf32>
      %36 = arith.truncf %35 : vector<8x128xf32> to vector<8x128xbf16>
      %c0_27 = arith.constant 0 : index
      %c0_28 = arith.constant 0 : index
      %37 = vector.load %arg9[%c0_27, %c0_28] : memref<128x256xbf16, #tpu.memory_space<vmem>>, vector<128x256xbf16>
      %cst_29 = arith.constant dense<0.000000e+00> : vector<8x256xf32>
      %38 = tpu.matmul %36, %37, %cst_29 {dimension_numbers = #tpu.dot_dimension_numbers<[1], [0], [0], [1], [0, 0, 1, 1], [], []>} : vector<8x128xbf16>, vector<128x256xbf16>, vector<8x256xf32> -> vector<8x256xf32>
      %c0_30 = arith.constant 0 : index
      %c0_31 = arith.constant 0 : index
      %39 = vector.load %arg10[%c0_30, %c0_31] : memref<1x256xf32, #tpu.memory_space<vmem>>, vector<1x256xf32>
      %40 = vector.broadcast %39 : vector<1x256xf32> to vector<8x256xf32>
      %41 = arith.addf %38, %40 : vector<8x256xf32>
      %cst_32 = arith.constant 0.000000e+00 : f32
      %42 = vector.broadcast %cst_32 : f32 to vector<8x256xf32>
      %43 = arith.cmpf ogt, %41, %42 : vector<8x256xf32>
      %cst_33 = arith.constant 0.00999999977 : f32
      %44 = vector.broadcast %cst_33 : f32 to vector<8x256xf32>
      %45 = arith.mulf %44, %41 : vector<8x256xf32>
      %46 = arith.select %43, %41, %45 : vector<8x256xi1>, vector<8x256xf32>
      %47 = arith.truncf %46 : vector<8x256xf32> to vector<8x256xbf16>
      %c0_34 = arith.constant 0 : index
      %c0_35 = arith.constant 0 : index
      %48 = vector.load %arg11[%c0_34, %c0_35] : memref<256x128xbf16, #tpu.memory_space<vmem>>, vector<256x128xbf16>
      %cst_36 = arith.constant dense<0.000000e+00> : vector<8x128xf32>
      %49 = tpu.matmul %47, %48, %cst_36 {dimension_numbers = #tpu.dot_dimension_numbers<[1], [0], [0], [1], [0, 0, 1, 1], [], []>} : vector<8x256xbf16>, vector<256x128xbf16>, vector<8x128xf32> -> vector<8x128xf32>
      %c0_37 = arith.constant 0 : index
      %c0_38 = arith.constant 0 : index
      %50 = vector.load %arg12[%c0_37, %c0_38] : memref<1x128xf32, #tpu.memory_space<vmem>>, vector<1x128xf32>
      %51 = vector.broadcast %50 : vector<1x128xf32> to vector<8x128xf32>
      %52 = arith.addf %49, %51 : vector<8x128xf32>
      %c0_39 = arith.constant 0 : index
      %c0_40 = arith.constant 0 : index
      %53 = vector.load %arg13[%c0_39, %c0_40] : memref<8x128xf32, #tpu.memory_space<vmem>>, vector<8x128xf32>
      tpu.vector_store %arg13[%c0_39, %c0_40], %52 {strides = array<i32>} : memref<8x128xf32, #tpu.memory_space<vmem>>, vector<8x128xf32>,
    } else {
    }
    return
  }
  func.func @transform_0(%arg0: i32, %arg1: i32) -> (i32, i32) {
    %c0_i32 = arith.constant 0 : i32
    %c0_i32_0 = arith.constant 0 : i32
    %c0_i32_1 = arith.constant 0 : i32
    return %c0_i32, %c0_i32_0 : i32, i32
  }
  func.func @transform_1(%arg0: i32, %arg1: i32) -> (i32, i32) {
    %c0_i32 = arith.constant 0 : i32
    %c0_i32_0 = arith.constant 0 : i32
    return %arg1, %c0_i32 : i32, i32
  }
  func.func @transform_2(%arg0: i32, %arg1: i32) -> (i32, i32) {
    %c0_i32 = arith.constant 0 : i32
    %c0_i32_0 = arith.constant 0 : i32
    return %c0_i32, %arg1 : i32, i32
  }
  func.func @transform_3(%arg0: i32, %arg1: i32) -> (i32, i32, i32) {
    %c0_i32 = arith.constant 0 : i32
    %c0_i32_0 = arith.constant 0 : i32
    return %arg0, %arg1, %c0_i32 : i32, i32, i32
  }
  func.func @transform_4(%arg0: i32, %arg1: i32) -> (i32, i32, i32) {
    %c0_i32 = arith.constant 0 : i32
    %c0_i32_0 = arith.constant 0 : i32
    %c0_i32_1 = arith.constant 0 : i32
    return %arg0, %c0_i32, %c0_i32_0 : i32, i32, i32
  }
  func.func @transform_5(%arg0: i32, %arg1: i32) -> (i32, i32, i32) {
    %c0_i32 = arith.constant 0 : i32
    %c0_i32_0 = arith.constant 0 : i32
    %c0_i32_1 = arith.constant 0 : i32
    return %arg0, %c0_i32, %c0_i32_0 : i32, i32, i32
  }
  func.func @transform_6(%arg0: i32, %arg1: i32) -> (i32, i32) {
    %c0_i32 = arith.constant 0 : i32
    %c0_i32_0 = arith.constant 0 : i32
    %c0_i32_1 = arith.constant 0 : i32
    return %c0_i32, %c0_i32_0 : i32, i32
  }
  func.func @transform_7(%arg0: i32, %arg1: i32) -> (i32, i32) {
    %c0_i32 = arith.constant 0 : i32
    %c0_i32_0 = arith.constant 0 : i32
    %c0_i32_1 = arith.constant 0 : i32
    return %c0_i32, %c0_i32_0 : i32, i32
  }
  func.func @transform_8(%arg0: i32, %arg1: i32) -> (i32, i32) {
    %c0_i32 = arith.constant 0 : i32
    %c0_i32_0 = arith.constant 0 : i32
    %c0_i32_1 = arith.constant 0 : i32
    return %c0_i32, %c0_i32_0 : i32, i32
  }
  func.func @transform_9(%arg0: i32, %arg1: i32) -> (i32, i32) {
    %c0_i32 = arith.constant 0 : i32
    %c0_i32_0 = arith.constant 0 : i32
    %c0_i32_1 = arith.constant 0 : i32
    return %c0_i32, %c0_i32_0 : i32, i32
  }
  func.func @transform_10(%arg0: i32, %arg1: i32) -> (i32, i32) {
    %c0_i32 = arith.constant 0 : i32
    %c0_i32_0 = arith.constant 0 : i32
    %c0_i32_1 = arith.constant 0 : i32
    return %c0_i32, %c0_i32_0 : i32, i32
  }
  func.func @transform_11(%arg0: i32, %arg1: i32) -> (i32, i32) {
    %c0_i32 = arith.constant 0 : i32
    %c0_i32_0 = arith.constant 0 : i32
    %c0_i32_1 = arith.constant 0 : i32
    return %c0_i32, %c0_i32_0 : i32, i32
  }
}

</mosaic_0001>

<llo_original>
// kernel: tpu_custom_call.1
$region0: #{tpu_custom_call.1}
  #allocation0 [shape = 'u32[]', space=smem, size = 0x4, offset = 0x4, fixed_abs, tag = 'smem constant byte address 0x4 - core index']
  #allocation1 [shape = 'u32[144,128]{1,0:T(1,128)}', space=vmem, size = 0x12000, scoped, tag = 'internal scratch']
  #allocation2 [shape = 'f32[16,128]{1,0:T(8,128)}', space=vmem, size = 0x2000, scoped, tag = 'scratch operand']
  #allocation3 [shape = 'bf16[16,128]{1,0:T(16,128)(2,1)}', space=vmem, size = 0x1000, scoped, tag = 'scratch operand']
  #allocation4 [shape = 'f32[16,128]{1,0:T(8,128)}', space=vmem, size = 0x2000, scoped, tag = 'scratch operand']
  %s0 = inlined_call_operand.hbm [shape: f32[16,128], index: 0, kind: input, shape index: {}]
  %s1 = inlined_call_operand.vmem [shape: s8[24,16], index: 1, kind: input, shape index: {}]
  %s2 = inlined_call_operand.vmem [shape: s8[16,24], index: 2, kind: input, shape index: {}]
  %s3 = inlined_call_operand.hbm [shape: bf16[3,24,128], index: 3, kind: input, shape index: {}]
  %s4 = inlined_call_operand.hbm [shape: bf16[3,128,128], index: 4, kind: input, shape index: {}]
  %s5 = inlined_call_operand.vmem [shape: f32[3,1,128], index: 5, kind: input, shape index: {}]
  %s6 = inlined_call_operand.vmem [shape: bf16[8,16], index: 6, kind: input, shape index: {}]
  %s7 = inlined_call_operand.hbm [shape: bf16[128,256], index: 7, kind: input, shape index: {}]
  %s8 = inlined_call_operand.vmem [shape: f32[1,256], index: 8, kind: input, shape index: {}]
  %s9 = inlined_call_operand.hbm [shape: bf16[256,128], index: 9, kind: input, shape index: {}]
  %s10 = inlined_call_operand.vmem [shape: f32[1,128], index: 10, kind: input, shape index: {}]
  %s11 = inlined_call_operand.hbm [shape: f32[8,128], index: 11, kind: output, shape index: {}]
  %s12 = sld [smem:[#allocation0]]
  $region113: #{tpu_custom_call.1} parent=0
    _
  %s14 = ssub.s32 1, %s12
  %s15 = scalar_select 0, %s14, %s12
  $region1: #{tpu_custom_call.1} parent=0
    #allocation5 [shape = 'u8[8192]{0}', space=vmem, size = 0x2000, scoped, tag = 'input window, operand 0, single buffered']
    #allocation6 [shape = 's32[2]{0}', space=sflag, size = 0x8, scoped, tag = 'scoped memory for tpu_custom_call.1']
    #allocation7 [shape = 's32[2]{0}', space=sflag, size = 0x8, scoped, tag = 'scoped memory for tpu_custom_call.1']
    #allocation8 [shape = 'u8[12288]{0}', space=vmem, size = 0x3000, scoped, tag = 'input window, operand 3']
    #allocation9 [shape = 's32[2]{0}', space=sflag, size = 0x8, scoped, tag = 'scoped memory for tpu_custom_call.1']
    #allocation10 [shape = 'u8[65536]{0}', space=vmem, size = 0x10000, scoped, tag = 'input window, operand 4']
    #allocation11 [shape = 'u8[65536]{0}', space=vmem, size = 0x10000, scoped, tag = 'input window, operand 7, single buffered']
    #allocation12 [shape = 's32[1]{0}', space=sflag, size = 0x4, scoped, tag = 'scoped memory for tpu_custom_call.1']
    #allocation13 [shape = 'u8[65536]{0}', space=vmem, size = 0x10000, scoped, tag = 'input window, operand 9, single buffered']
    #allocation14 [shape = 'u8[4096]{0}', space=vmem, size = 0x1000, scoped, tag = 'output window, operand 0, single buffered']
    %16 = vsyncpa [#allocation6], 0
    %17 = vsyncpa [#allocation9], 0
    %s18 = scalar_lea.sflag [#allocation9], 1
    %19 = vsyncpa %s18, 0
    %20 = vsyncpa [#allocation12], 0
    %21 = vsyncpa [#allocation7], 0
    loop: start=0, step=1, limit=5
    $region2: #{tpu_custom_call.1} parent=1 // loop_pre_header
      _
    $region3: #{tpu_custom_call.1} parent=1 // loop_header
      %s23 = sphi 0, %s27
      %p24 = scmp.ge.s32.totalorder %s23, 5
      %s30 = sphi 0, %s42
      %s31 = sphi 0, %s38
      %s32 = sphi 0, %s30
      %s33 = sphi 0, %s31
      %s34 = sphi 0, %s32
      %s35 = sphi 0, %s33
      %s43 = sphi 0, %s43
      %s45 = sphi 0, %s43
      %s46 = sphi 0, %s45
      %s60 = sphi 0, %s46
      %s66 = sphi 0, %s68
      %s69 = sphi 0, %s66
      %s70 = sphi 0, %s69
      %s86 = sphi 0, %s70
      %s92 = sphi 0, %s94
      %s95 = sphi 0, %s92
      %s96 = sphi 0, %s95
      %s112 = sphi 0, %s96
      %s120 = sphi 0, %s122
      %s123 = sphi 0, %s120
      %s124 = sphi 0, %s123
      %s140 = sphi 0, %s124
      %s146 = sphi 0, %s148
      %s149 = sphi 0, %s146
      %s150 = sphi 0, %s149
      %s166 = sphi 0, %s150
      %s172 = sphi 0, %s174
      %s175 = sphi 0, %s172
      %s176 = sphi 0, %s175
      %s192 = sphi 0, %s176
      %s196 = sphi 0, %s196
      %s198 = sphi 0, %s196
      %s199 = sphi 0, %s198
      %s213 = sphi 0, %s199
      %s217 = sphi 0, %s217
      %s219 = sphi 0, %s217
      %s220 = sphi 0, %s219
      %s234 = sphi 0, %s220
      %s238 = sphi 0, %s238
      %s240 = sphi 0, %s238
      %s241 = sphi 0, %s240
      %s255 = sphi 0, %s241
      %s259 = sphi 0, %s259
      %s261 = sphi 0, %s259
      %s262 = sphi 0, %s261
      %s276 = sphi 0, %s262
      %s280 = sphi 0, %s280
      %s282 = sphi 0, %s280
      %s283 = sphi 0, %s282
      %s297 = sphi 0, %s283
      %s301 = sphi 0, %s301
      %s303 = sphi 0, %s301
      %s304 = sphi 0, %s303
      %s318 = sphi 0, %s304
    $region4: #{tpu_custom_call.1} parent=1 // loop_header_branch
      %26 = sbr.rel (%p24) target = $region8
    $region5: #{tpu_custom_call.1} parent=1 // loop_body
      %s28 = ssub.s32 %s23, 1
      %s29 = ssub.s32 %s23, 2
      %s36 = sadd.s32 1, %s31
      %p37 = scmp.ge.s32.totalorder %s36, 1
      %s38 = scalar_select %p37, 0, %s36
      %s39 = sadd.s32 1, %s30
      %s40 = scalar_select %p37, %s39, %s30
      %p41 = scmp.ge.s32.totalorder %s40, 3
      %s42 = scalar_select %p41, 0, %s40
      %s44 = sadd.s32 %s43, 1
      %p47 = scmp.eq.s32.totalorder %s23, 2
      %p48 = scmp.ne.s32.totalorder %s43, %s45
      %p49 = scmp.eq.s32.totalorder %s23, 0
      %p50 = por %p48, %p49
      %p51 = scmp.ne.s32.totalorder %s43, %s45
      %p52 = scmp.eq.s32.totalorder %s28, 2
      %p53 = por %p51, %p52
      %p54 = scmp.ne.s32.totalorder %s45, %s46
      %p55 = scmp.eq.s32.totalorder %s28, 0
      %p56 = por %p54, %p55
      %p57 = scmp.ne.s32.totalorder %s45, %s46
      %p58 = scmp.eq.s32.totalorder %s29, 2
      %p59 = por %p57, %p58
      %p61 = scmp.ne.s32.totalorder %s46, %s60
      %p62 = scmp.eq.s32.totalorder %s29, 0
      %p63 = por %p61, %p62
      %s64 = ssub.s32 %s31, %s38
      %p65 = scmp.eq.s32.totalorder %s64, 0
      %s67 = sadd.s32 %s66, 1
      %s68 = scalar_select %p65, %s66, %s67
      %p71 = pneg %p65
      %p72 = scmp.eq.s32.totalorder %s23, 2
      %p73 = por %p71, %p72
      %p74 = scmp.ne.s32.totalorder %s66, %s69
      %p75 = scmp.eq.s32.totalorder %s23, 0
      %p76 = por %p74, %p75
      %p77 = scmp.ne.s32.totalorder %s66, %s69
      %p78 = scmp.eq.s32.totalorder %s28, 2
      %p79 = por %p77, %p78
      %p80 = scmp.ne.s32.totalorder %s69, %s70
      %p81 = scmp.eq.s32.totalorder %s28, 0
      %p82 = por %p80, %p81
      %p83 = scmp.ne.s32.totalorder %s69, %s70
      %p84 = scmp.eq.s32.totalorder %s29, 2
      %p85 = por %p83, %p84
      %p87 = scmp.ne.s32.totalorder %s70, %s86
      %p88 = scmp.eq.s32.totalorder %s29, 0
      %p89 = por %p87, %p88
      %s90 = ssub.s32 %s31, %s38
      %p91 = scmp.eq.s32.totalorder %s90, 0
      %s93 = sadd.s32 %s92, 1
      %s94 = scalar_select %p91, %s92, %s93
      %p97 = pneg %p91
      %p98 = scmp.eq.s32.totalorder %s23, 2
      %p99 = por %p97, %p98
      %p100 = scmp.ne.s32.totalorder %s92, %s95
      %p101 = scmp.eq.s32.totalorder %s23, 0
      %p102 = por %p100, %p101
      %p103 = scmp.ne.s32.totalorder %s92, %s95
      %p104 = scmp.eq.s32.totalorder %s28, 2
      %p105 = por %p103, %p104
      %p106 = scmp.ne.s32.totalorder %s95, %s96
      %p107 = scmp.eq.s32.totalorder %s28, 0
      %p108 = por %p106, %p107
      %p109 = scmp.ne.s32.totalorder %s95, %s96
      %p110 = scmp.eq.s32.totalorder %s29, 2
      %p111 = por %p109, %p110
      %p113 = scmp.ne.s32.totalorder %s96, %s112
      %p114 = scmp.eq.s32.totalorder %s29, 0
      %p115 = por %p113, %p114
      %s116 = ssub.s32 %s30, %s42
      %s117 = ssub.s32 %s31, %s38
      %s118 = sor.u32 %s116, %s117
      %p119 = scmp.eq.s32.totalorder %s118, 0
      %s121 = sadd.s32 %s120, 1
      %s122 = scalar_select %p119, %s120, %s121
      %p125 = pneg %p119
      %p126 = scmp.eq.s32.totalorder %s23, 2
      %p127 = por %p125, %p126
      %p128 = scmp.ne.s32.totalorder %s120, %s123
      %p129 = scmp.eq.s32.totalorder %s23, 0
      %p130 = por %p128, %p129
      %p131 = scmp.ne.s32.totalorder %s120, %s123
      %p132 = scmp.eq.s32.totalorder %s28, 2
      %p133 = por %p131, %p132
      %p134 = scmp.ne.s32.totalorder %s123, %s124
      %p135 = scmp.eq.s32.totalorder %s28, 0
      %p136 = por %p134, %p135
      %p137 = scmp.ne.s32.totalorder %s123, %s124
      %p138 = scmp.eq.s32.totalorder %s29, 2
      %p139 = por %p137, %p138
      %p141 = scmp.ne.s32.totalorder %s124, %s140
      %p142 = scmp.eq.s32.totalorder %s29, 0
      %p143 = por %p141, %p142
      %s144 = ssub.s32 %s30, %s42
      %p145 = scmp.eq.s32.totalorder %s144, 0
      %s147 = sadd.s32 %s146, 1
      %s148 = scalar_select %p145, %s146, %s147
      %p151 = pneg %p145
      %p152 = scmp.eq.s32.totalorder %s23, 2
      %p153 = por %p151, %p152
      %p154 = scmp.ne.s32.totalorder %s146, %s149
      %p155 = scmp.eq.s32.totalorder %s23, 0
      %p156 = por %p154, %p155
      %p157 = scmp.ne.s32.totalorder %s146, %s149
      %p158 = scmp.eq.s32.totalorder %s28, 2
      %p159 = por %p157, %p158
      %p160 = scmp.ne.s32.totalorder %s149, %s150
      %p161 = scmp.eq.s32.totalorder %s28, 0
      %p162 = por %p160, %p161
      %p163 = scmp.ne.s32.totalorder %s149, %s150
      %p164 = scmp.eq.s32.totalorder %s29, 2
      %p165 = por %p163, %p164
      %p167 = scmp.ne.s32.totalorder %s150, %s166
      %p168 = scmp.eq.s32.totalorder %s29, 0
      %p169 = por %p167, %p168
      %s170 = ssub.s32 %s30, %s42
      %p171 = scmp.eq.s32.totalorder %s170, 0
      %s173 = sadd.s32 %s172, 1
      %s174 = scalar_select %p171, %s172, %s173
      %p177 = pneg %p171
      %p178 = scmp.eq.s32.totalorder %s23, 2
      %p179 = por %p177, %p178
      %p180 = scmp.ne.s32.totalorder %s172, %s175
      %p181 = scmp.eq.s32.totalorder %s23, 0
      %p182 = por %p180, %p181
      %p183 = scmp.ne.s32.totalorder %s172, %s175
      %p184 = scmp.eq.s32.totalorder %s28, 2
      %p185 = por %p183, %p184
      %p186 = scmp.ne.s32.totalorder %s175, %s176
      %p187 = scmp.eq.s32.totalorder %s28, 0
      %p188 = por %p186, %p187
      %p189 = scmp.ne.s32.totalorder %s175, %s176
      %p190 = scmp.eq.s32.totalorder %s29, 2
      %p191 = por %p189, %p190
      %p193 = scmp.ne.s32.totalorder %s176, %s192
      %p194 = scmp.eq.s32.totalorder %s29, 0
      %p195 = por %p193, %p194
      %s197 = sadd.s32 %s196, 1
      %p200 = scmp.eq.s32.totalorder %s23, 2
      %p201 = scmp.ne.s32.totalorder %s196, %s198
      %p202 = scmp.eq.s32.totalorder %s23, 0
      %p203 = por %p201, %p202
      %p204 = scmp.ne.s32.totalorder %s196, %s198
      %p205 = scmp.eq.s32.totalorder %s28, 2
      %p206 = por %p204, %p205
      %p207 = scmp.ne.s32.totalorder %s198, %s199
      %p208 = scmp.eq.s32.totalorder %s28, 0
      %p209 = por %p207, %p208
      %p210 = scmp.ne.s32.totalorder %s198, %s199
      %p211 = scmp.eq.s32.totalorder %s29, 2
      %p212 = por %p210, %p211
      %p214 = scmp.ne.s32.totalorder %s199, %s213
      %p215 = scmp.eq.s32.totalorder %s29, 0
      %p216 = por %p214, %p215
      %s218 = sadd.s32 %s217, 1
      %p221 = scmp.eq.s32.totalorder %s23, 2
      %p222 = scmp.ne.s32.totalorder %s217, %s219
      %p223 = scmp.eq.s32.totalorder %s23, 0
      %p224 = por %p222, %p223
      %p225 = scmp.ne.s32.totalorder %s217, %s219
      %p226 = scmp.eq.s32.totalorder %s28, 2
      %p227 = por %p225, %p226
      %p228 = scmp.ne.s32.totalorder %s219, %s220
      %p229 = scmp.eq.s32.totalorder %s28, 0
      %p230 = por %p228, %p229
      %p231 = scmp.ne.s32.totalorder %s219, %s220
      %p232 = scmp.eq.s32.totalorder %s29, 2
      %p233 = por %p231, %p232
      %p235 = scmp.ne.s32.totalorder %s220, %s234
      %p236 = scmp.eq.s32.totalorder %s29, 0
      %p237 = por %p235, %p236
      %s239 = sadd.s32 %s238, 1
      %p242 = scmp.eq.s32.totalorder %s23, 2
      %p243 = scmp.ne.s32.totalorder %s238, %s240
      %p244 = scmp.eq.s32.totalorder %s23, 0
      %p245 = por %p243, %p244
      %p246 = scmp.ne.s32.totalorder %s238, %s240
      %p247 = scmp.eq.s32.totalorder %s28, 2
      %p248 = por %p246, %p247
      %p249 = scmp.ne.s32.totalorder %s240, %s241
      %p250 = scmp.eq.s32.totalorder %s28, 0
      %p251 = por %p249, %p250
      %p252 = scmp.ne.s32.totalorder %s240, %s241
      %p253 = scmp.eq.s32.totalorder %s29, 2
      %p254 = por %p252, %p253
      %p256 = scmp.ne.s32.totalorder %s241, %s255
      %p257 = scmp.eq.s32.totalorder %s29, 0
      %p258 = por %p256, %p257
      %s260 = sadd.s32 %s259, 1
      %p263 = scmp.eq.s32.totalorder %s23, 2
      %p264 = scmp.ne.s32.totalorder %s259, %s261
      %p265 = scmp.eq.s32.totalorder %s23, 0
      %p266 = por %p264, %p265
      %p267 = scmp.ne.s32.totalorder %s259, %s261
      %p268 = scmp.eq.s32.totalorder %s28, 2
      %p269 = por %p267, %p268
      %p270 = scmp.ne.s32.totalorder %s261, %s262
      %p271 = scmp.eq.s32.totalorder %s28, 0
      %p272 = por %p270, %p271
      %p273 = scmp.ne.s32.totalorder %s261, %s262
      %p274 = scmp.eq.s32.totalorder %s29, 2
      %p275 = por %p273, %p274
      %p277 = scmp.ne.s32.totalorder %s262, %s276
      %p278 = scmp.eq.s32.totalorder %s29, 0
      %p279 = por %p277, %p278
      %s281 = sadd.s32 %s280, 1
      %p284 = scmp.eq.s32.totalorder %s23, 2
      %p285 = scmp.ne.s32.totalorder %s280, %s282
      %p286 = scmp.eq.s32.totalorder %s23, 0
      %p287 = por %p285, %p286
      %p288 = scmp.ne.s32.totalorder %s280, %s282
      %p289 = scmp.eq.s32.totalorder %s28, 2
      %p290 = por %p288, %p289
      %p291 = scmp.ne.s32.totalorder %s282, %s283
      %p292 = scmp.eq.s32.totalorder %s28, 0
      %p293 = por %p291, %p292
      %p294 = scmp.ne.s32.totalorder %s282, %s283
      %p295 = scmp.eq.s32.totalorder %s29, 2
      %p296 = por %p294, %p295
      %p298 = scmp.ne.s32.totalorder %s283, %s297
      %p299 = scmp.eq.s32.totalorder %s29, 0
      %p300 = por %p298, %p299
      %s302 = sadd.s32 %s301, 1
      %p305 = scmp.eq.s32.totalorder %s23, 2
      %p306 = scmp.ne.s32.totalorder %s301, %s303
      %p307 = scmp.eq.s32.totalorder %s23, 0
      %p308 = por %p306, %p307
      %p309 = scmp.ne.s32.totalorder %s301, %s303
      %p310 = scmp.eq.s32.totalorder %s28, 2
      %p311 = por %p309, %p310
      %p312 = scmp.ne.s32.totalorder %s303, %s304
      %p313 = scmp.eq.s32.totalorder %s28, 0
      %p314 = por %p312, %p313
      %p315 = scmp.ne.s32.totalorder %s303, %s304
      %p316 = scmp.eq.s32.totalorder %s29, 2
      %p317 = por %p315, %p316
      %p319 = scmp.ne.s32.totalorder %s304, %s318
      %p320 = scmp.eq.s32.totalorder %s29, 0
      %p321 = por %p319, %p320
      %p322 = scmp.le.s32.totalorder 1, %s23
      %p323 = scmp.lt.s32.totalorder %s23, 4
      %p324 = pnand %p322, %p323
      %p325 = pneg %p324
      // Predicated region
      $region9: #{tpu_custom_call.1} parent=5 // pred_check
        _
      $region10: #{tpu_custom_call.1} parent=5 // pred_check_branch
        %327 = sbr.rel (%p324) target = $region12
      $region11: #{tpu_custom_call.1} parent=5 // pred_region
        %s328 = ssub.s32 %s23, 1
        // Predicated region
        $region13: #{tpu_custom_call.1} parent=11 // pred_check
          %p329 = pneg %p56
        $region14: #{tpu_custom_call.1} parent=11 // pred_check_branch
          %331 = sbr.rel (%p329) target = $region16
        $region15: #{tpu_custom_call.1} parent=11 // pred_region
          %s333 = ssub.s32 256, 256
          %334 = vsyncadd [#allocation6], %s333
          %s335 = sshll.u32 [#allocation5], 4
          %s336 = int_to_ptr.vmem [resolvable:$true] %s335
          %341 = dma.hbm_to_vmem [thread:$0]  %s0, 256, %s336, [#allocation6], 128, 128, 8
        $region16: #{tpu_custom_call.1} parent=11 // pred_fallthru
          _
        // Predicated region
        $region17: #{tpu_custom_call.1} parent=11 // pred_check
          %p342 = pneg %p82
        $region18: #{tpu_custom_call.1} parent=11 // pred_check_branch
          %344 = sbr.rel (%p342) target = $region20
        $region19: #{tpu_custom_call.1} parent=11 // pred_region
          %s345 = smul.u32 3, %s33
          %p346 = scmp.lt.s32.totalorder %s345, 2
          %s347 = scalar_select %p346, %s345, 2
          %s348 = smul.addr %s347, 2
          %s349 = scalar_lea.vmem %s1, %s348
          %s350 = smul.u32 3, %s33
        $region20: #{tpu_custom_call.1} parent=11 // pred_fallthru
          _
        // Predicated region
        $region21: #{tpu_custom_call.1} parent=11 // pred_check
          %p351 = pneg %p108
        $region22: #{tpu_custom_call.1} parent=11 // pred_check_branch
          %353 = sbr.rel (%p351) target = $region24
        $region23: #{tpu_custom_call.1} parent=11 // pred_region
          %p354 = scmp.lt.s32.totalorder %s33, 0
          %s355 = scalar_select %p354, %s33, 0
          %s356 = smul.addr %s355, 2
          %s357 = scalar_lea.vmem %s2, %s356
        $region24: #{tpu_custom_call.1} parent=11 // pred_fallthru
          _
        // Predicated region
        $region25: #{tpu_custom_call.1} parent=11 // pred_check
          %p358 = pneg %p209
        $region26: #{tpu_custom_call.1} parent=11 // pred_check_branch
          %360 = sbr.rel (%p358) target = $region28
        $region27: #{tpu_custom_call.1} parent=11 // pred_region
          _
        $region28: #{tpu_custom_call.1} parent=11 // pred_fallthru
          _
        // Predicated region
        $region29: #{tpu_custom_call.1} parent=11 // pred_check
          %p361 = pneg %p230
        $region30: #{tpu_custom_call.1} parent=11 // pred_check_branch
          %363 = sbr.rel (%p361) target = $region32
        $region31: #{tpu_custom_call.1} parent=11 // pred_region
          %s365 = ssub.s32 2048, 2048
          %366 = vsyncadd [#allocation12], %s365
          %s367 = sshll.u32 [#allocation11], 4
          %s368 = int_to_ptr.vmem [resolvable:$true] %s367
          %373 = dma.hbm_to_vmem [thread:$0]  %s7, 2048, %s368, [#allocation12], 128, 128, 8
        $region32: #{tpu_custom_call.1} parent=11 // pred_fallthru
          _
        // Predicated region
        $region33: #{tpu_custom_call.1} parent=11 // pred_check
          %p374 = pneg %p251
        $region34: #{tpu_custom_call.1} parent=11 // pred_check_branch
          %376 = sbr.rel (%p374) target = $region36
        $region35: #{tpu_custom_call.1} parent=11 // pred_region
          _
        $region36: #{tpu_custom_call.1} parent=11 // pred_fallthru
          _
        // Predicated region
        $region37: #{tpu_custom_call.1} parent=11 // pred_check
          %p377 = pneg %p272
        $region38: #{tpu_custom_call.1} parent=11 // pred_check_branch
          %379 = sbr.rel (%p377) target = $region40
        $region39: #{tpu_custom_call.1} parent=11 // pred_region
          %s381 = ssub.s32 2048, 2048
          %382 = vsyncadd [#allocation12], %s381
          %s383 = sshll.u32 [#allocation13], 4
          %s384 = int_to_ptr.vmem [resolvable:$true] %s383
          %389 = dma.hbm_to_vmem [thread:$0]  %s9, 2048, %s384, [#allocation12], 64, 64, 4
        $region40: #{tpu_custom_call.1} parent=11 // pred_fallthru
          _
        // Predicated region
        $region41: #{tpu_custom_call.1} parent=11 // pred_check
          %p390 = pneg %p293
        $region42: #{tpu_custom_call.1} parent=11 // pred_check_branch
          %392 = sbr.rel (%p390) target = $region44
        $region43: #{tpu_custom_call.1} parent=11 // pred_region
          _
        $region44: #{tpu_custom_call.1} parent=11 // pred_fallthru
          _
      $region12: #{tpu_custom_call.1} parent=5 // pred_fallthru
        _
      %p393 = scmp.lt.s32.totalorder %s23, 3
      // Predicated region
      $region45: #{tpu_custom_call.1} parent=5 // pred_check
        %p394 = pneg %p393
      $region46: #{tpu_custom_call.1} parent=5 // pred_check_branch
        %396 = sbr.rel (%p394) target = $region48
      $region47: #{tpu_custom_call.1} parent=5 // pred_region
        // Predicated region
        $region49: #{tpu_custom_call.1} parent=47 // pred_check
          %p397 = pneg %p130
        $region50: #{tpu_custom_call.1} parent=47 // pred_check_branch
          %399 = sbr.rel (%p397) target = $region52
        $region51: #{tpu_custom_call.1} parent=47 // pred_region
          %s400 = sand.u32 %s23, 1
          %s401 = scalar_lea.sflag [#allocation9], %s400
          %s402 = sand.u32 %s120, 1
          %s403 = smul.addr %s402, 12
          %s404 = scalar_lea.vmem [#allocation8], %s403
          %s405 = smul.u32 3, %s31
          %s407 = ssub.s32 192, 192
          %408 = vsyncadd %s401, %s407
          %s409 = smul.addr %s30, 3
          %s410 = sadd.s32 %s405, %s409
          %s411 = smul.addr %s410, 64
          %s412 = scalar_lea.hbm %s3, %s411
          %s413 = sshll.u32 %s404, 4
          %s414 = int_to_ptr.vmem [resolvable:$true] %s413
          %419 = dma.hbm_to_vmem [thread:$0]  %s412, 192, %s414, %s401, 64, 64, 4
        $region52: #{tpu_custom_call.1} parent=47 // pred_fallthru
          _
        // Predicated region
        $region53: #{tpu_custom_call.1} parent=47 // pred_check
          %p420 = pneg %p156
        $region54: #{tpu_custom_call.1} parent=47 // pred_check_branch
          %422 = sbr.rel (%p420) target = $region56
        $region55: #{tpu_custom_call.1} parent=47 // pred_region
          %s423 = sand.u32 %s23, 1
          %s424 = scalar_lea.sflag [#allocation9], %s423
          %s425 = sand.u32 %s146, 1
          %s426 = smul.addr %s425, 64
          %s427 = scalar_lea.vmem [#allocation10], %s426
          %s429 = ssub.s32 1024, 1024
          %430 = vsyncadd %s424, %s429
          %s431 = smul.addr %s30, 16
          %s432 = smul.addr %s431, 64
          %s433 = scalar_lea.hbm %s4, %s432
          %s434 = sshll.u32 %s427, 4
          %s435 = int_to_ptr.vmem [resolvable:$true] %s434
          %440 = dma.hbm_to_vmem [thread:$0]  %s433, 1024, %s435, %s424, 64, 64, 4
        $region56: #{tpu_custom_call.1} parent=47 // pred_fallthru
          _
        // Predicated region
        $region57: #{tpu_custom_call.1} parent=47 // pred_check
          %p441 = pneg %p182
        $region58: #{tpu_custom_call.1} parent=47 // pred_check_branch
          %443 = sbr.rel (%p441) target = $region60
        $region59: #{tpu_custom_call.1} parent=47 // pred_region
          %p444 = scmp.lt.s32.totalorder %s30, 2
          %s445 = scalar_select %p444, %s30, 2
          %s446 = scalar_lea.vmem %s5, %s445
        $region60: #{tpu_custom_call.1} parent=47 // pred_fallthru
          _
      $region48: #{tpu_custom_call.1} parent=5 // pred_fallthru
        _
      %p447 = scmp.le.s32.totalorder 1, %s23
      %p448 = scmp.lt.s32.totalorder %s23, 4
      %p449 = pnand %p447, %p448
      %p450 = pneg %p449
      // Predicated region
      $region61: #{tpu_custom_call.1} parent=5 // pred_check
        _
      $region62: #{tpu_custom_call.1} parent=5 // pred_check_branch
        %452 = sbr.rel (%p449) target = $region64
      $region63: #{tpu_custom_call.1} parent=5 // pred_region
        %s453 = ssub.s32 %s23, 1
        // Predicated region
        $region65: #{tpu_custom_call.1} parent=63 // pred_check
          %p454 = pneg %p56
        $region66: #{tpu_custom_call.1} parent=63 // pred_check_branch
          %456 = sbr.rel (%p454) target = $region68
        $region67: #{tpu_custom_call.1} parent=63 // pred_region
          %457 = dma.done [#allocation6], 256
        $region68: #{tpu_custom_call.1} parent=63 // pred_fallthru
          _
        %s458 = sand.u32 %s28, 1
        %s459 = scalar_lea.sflag [#allocation9], %s458
        %s460 = sand.u32 %s123, 1
        %s461 = smul.addr %s460, 12
        %s462 = scalar_lea.vmem [#allocation8], %s461
        // Predicated region
        $region69: #{tpu_custom_call.1} parent=63 // pred_check
          %p463 = pneg %p136
        $region70: #{tpu_custom_call.1} parent=63 // pred_check_branch
          %465 = sbr.rel (%p463) target = $region72
        $region71: #{tpu_custom_call.1} parent=63 // pred_region
          %466 = dma.done %s459, 192
        $region72: #{tpu_custom_call.1} parent=63 // pred_fallthru
          _
        %s467 = sand.u32 %s28, 1
        %s468 = scalar_lea.sflag [#allocation9], %s467
        %s469 = sand.u32 %s149, 1
        %s470 = smul.addr %s469, 64
        %s471 = scalar_lea.vmem [#allocation10], %s470
        // Predicated region
        $region73: #{tpu_custom_call.1} parent=63 // pred_check
          %p472 = pneg %p162
        $region74: #{tpu_custom_call.1} parent=63 // pred_check_branch
          %474 = sbr.rel (%p472) target = $region76
        $region75: #{tpu_custom_call.1} parent=63 // pred_region
          %475 = dma.done %s468, 1024
        $region76: #{tpu_custom_call.1} parent=63 // pred_fallthru
          _
        // Predicated region
        $region77: #{tpu_custom_call.1} parent=63 // pred_check
          %p476 = pneg %p230
        $region78: #{tpu_custom_call.1} parent=63 // pred_check_branch
          %478 = sbr.rel (%p476) target = $region80
        $region79: #{tpu_custom_call.1} parent=63 // pred_region
          %479 = dma.done [#allocation12], 2048
        $region80: #{tpu_custom_call.1} parent=63 // pred_fallthru
          _
        // Predicated region
        $region81: #{tpu_custom_call.1} parent=63 // pred_check
          %p480 = pneg %p272
        $region82: #{tpu_custom_call.1} parent=63 // pred_check_branch
          %482 = sbr.rel (%p480) target = $region84
        $region83: #{tpu_custom_call.1} parent=63 // pred_region
          %483 = dma.done [#allocation12], 2048
        $region84: #{tpu_custom_call.1} parent=63 // pred_fallthru
          _
        %p484 = pneg %p56
        %p485 = pneg %p53
        %s486 = smul.u32 3, %s33
        %p487 = scmp.lt.s32.totalorder %s486, 2
        %s488 = scalar_select %p487, %s486, 2
        %s489 = smul.addr %s488, 2
        %s490 = scalar_lea.vmem %s1, %s489
        %p491 = pneg %p82
        %p492 = pneg %p79
        %p493 = scmp.lt.s32.totalorder %s33, 0
        %s494 = scalar_select %p493, %s33, 0
        %s495 = smul.addr %s494, 2
        %s496 = scalar_lea.vmem %s2, %s495
        %p497 = pneg %p108
        %p498 = pneg %p105
        %s499 = sand.u32 %s28, 1
        %s500 = scalar_lea.sflag [#allocation9], %s499
        %s501 = sand.u32 %s123, 1
        %s502 = smul.addr %s501, 12
        %s503 = scalar_lea.vmem [#allocation8], %s502
        %p504 = pneg %p136
        %p505 = pneg %p133
        %s506 = sand.u32 %s28, 1
        %s507 = scalar_lea.sflag [#allocation9], %s506
        %s508 = sand.u32 %s149, 1
        %s509 = smul.addr %s508, 64
        %s510 = scalar_lea.vmem [#allocation10], %s509
        %p511 = pneg %p162
        %p512 = pneg %p159
        %p513 = scmp.lt.s32.totalorder %s32, 2
        %s514 = scalar_select %p513, %s32, 2
        %s515 = scalar_lea.vmem %s5, %s514
        %p516 = pneg %p188
        %p517 = pneg %p185
        %p518 = pneg %p209
        %p519 = pneg %p206
        %p520 = pneg %p230
        %p521 = pneg %p227
        %p522 = pneg %p251
        %p523 = pneg %p248
        %p524 = pneg %p272
        %p525 = pneg %p269
        %p526 = pneg %p293
        %p527 = pneg %p290
        %p528 = pneg %p314
        %p529 = pneg %p311
        %s530 = smul.u32 3, %s33
        %p531 = scmp.lt.s32.totalorder %s530, 2
        %s532 = scalar_select %p531, %s530, 2
        %s533 = smul.addr %s532, 2
        %s534 = scalar_lea.vmem %s1, %s533
        %s535 = smul.u32 3, %s33
        %p536 = scmp.lt.s32.totalorder %s33, 0
        %s537 = scalar_select %p536, %s33, 0
        %s538 = smul.addr %s537, 2
        %s539 = scalar_lea.vmem %s2, %s538
        %s540 = smul.u32 3, %s33
        %p541 = scmp.lt.s32.totalorder %s32, 2
        %s542 = scalar_select %p541, %s32, 2
        %s543 = scalar_lea.vmem %s5, %s542
        %p545 = scmp.eq.s32.totalorder %s32, 0
        %p546 = scmp.eq.s32.totalorder %s33, 0
        %p547 = pnand %p545, %p546
        %p548 = pneg %p547
        // Predicated region
        $region85: #{tpu_custom_call.1} parent=63 // pred_check
          _
        $region86: #{tpu_custom_call.1} parent=63 // pred_check_branch
          %550 = sbr.rel (%p547) target = $region88
        $region87: #{tpu_custom_call.1} parent=63 // pred_region
          %v551 = vld [vmem:[#allocation5] sm:$0xff]
          %v552 = vld [vmem:[#allocation5 + $0x8] sm:$0xff]
          %553 = vst [vmem:[#allocation2] sm:$0xff] %v551
          %554 = vst [vmem:[#allocation2 + $0x8] sm:$0xff] %v552
          %v555 = vpack.c.bf16 %v552, %v551
          %556 = vst [vmem:[#allocation3] sm:$0xff] %v555
        $region88: #{tpu_custom_call.1} parent=63 // pred_fallthru
          _
        // Predicated region
        $region89: #{tpu_custom_call.1} parent=63 // pred_check
          %p557 = pneg %p546
        $region90: #{tpu_custom_call.1} parent=63 // pred_check_branch
          %559 = sbr.rel (%p557) target = $region92
        $region91: #{tpu_custom_call.1} parent=63 // pred_region
          %560 = vst [vmem:[#allocation4] sm:$0xff] 0.0
          %561 = vst [vmem:[#allocation4 + $0x8] sm:$0xff] 0.0
        $region92: #{tpu_custom_call.1} parent=63 // pred_fallthru
          _
        %v562 = vld [vmem:[%s534] sm:$0x3]
        %v563 = vld [vmem:[%s534 + $0x2] sm:$0x3]
        %v564 = vld [vmem:[%s534 + $0x4] sm:$0x3]
        %v565 = vunpack.c.l.s8.bf16 %v562
        %v566 = vunpack.c.l.s8.bf16 %v563
        %v567 = vunpack.c.l.s8.bf16 %v564
        %v568 = vld [vmem:[%s539] sm:$0x3]
        %v569 = vld [vmem:[%s539 + $0x2] sm:$0x3]
        %v570 = vunpack.c.l.s8.bf16 %v568
        %v571 = vunpack.c.l.s8.bf16 %v569
        %v572 = vld [vmem:[#allocation3] sm:$0xff]
        %v573 = vld [vmem:[%s462] sm:$0xf]
        %v574 = vld [vmem:[%s462 + $0x4] sm:$0xf]
        %v575 = vld [vmem:[%s462 + $0x8] sm:$0xf]
        %v576 = vunpack.c.l.bf16 %v573
        %v577 = vunpack.c.l.bf16 %v574
        %v578 = vunpack.c.l.bf16 %v575
        %v582 = vunpack.c.l.b16 %v565
        %v583 = vunpack.c.l.b16 %v566
        %v584 = vunpack.c.l.b16 %v567
        %v585 = vpack.c.b16 %v583, %v582
        %v586 = vpack.c.b16 %v584, %v584
        %vm587 = vcmask 130048
        %v589 = vsel %vm587, %v585, 0
        %v592 = vsel %vm587, %v586, 0
        %594 = vmatprep.subr.bf16.mxu0 0
        %595 = vmatpush1.bf16.msra.mxu0 %v572
        %596 = vmatprep.subr.bf16.mxu0 0
        %597 = vmatpush1.bf16.msra.mxu0 0
        %598 = vmatprep.subr.bf16.mxu0 0
        %599 = vmatpush1.bf16.msra.mxu0 0
        %600 = vmatprep.subr.bf16.mxu0 0
        %601 = vmatpush1.bf16.msra.mxu0 0
        %602 = vmatprep.subr.bf16.mxu0 0
        %603 = vmatpush1.bf16.msra.mxu0 0
        %604 = vmatprep.subr.bf16.mxu0 0
        %605 = vmatpush1.bf16.msra.mxu0 0
        %606 = vmatprep.subr.bf16.mxu0 0
        %607 = vmatpush1.bf16.msra.mxu0 0
        %608 = vmatprep.subr.bf16.mxu0 0
        %609 = vmatpush1.bf16.msra.mxu0 0
        %610 = vmatprep.subr.bf16.mxu0 0
        %611 = vmatpush1.bf16.msra.mxu0 0
        %612 = vmatprep.subr.bf16.mxu0 0
        %613 = vmatpush1.bf16.msra.mxu0 0
        %614 = vmatprep.subr.bf16.mxu0 0
        %615 = vmatpush1.bf16.msra.mxu0 0
        %616 = vmatprep.subr.bf16.mxu0 0
        %617 = vmatpush1.bf16.msra.mxu0 0
        %618 = vmatprep.subr.bf16.mxu0 0
        %619 = vmatpush1.bf16.msra.mxu0 0
        %620 = vmatprep.subr.bf16.mxu0 0
        %621 = vmatpush1.bf16.msra.mxu0 0
        %622 = vmatprep.subr.bf16.mxu0 0
        %623 = vmatpush1.bf16.msra.mxu0 0
        %624 = vmatprep.subr.bf16.mxu0 0
        %625 = vmatpush1.bf16.msra.mxu0 0
        %626 = vmatprep.mubr.bf16.mxu0 0
        %627 = vmatmul.mubr.bf16.gmra.mrb[0].mxu0 %v589
        %v628 = vpop.f32.mrb[0].mxu0
        %v629 = vadd.f32 %v576, %v628
        %v630 = vpop.f32.mrb[0].mxu0
        %v631 = vpop.f32.mrb[0].mxu0
        %v632 = vadd.f32 %v577, %v631
        %v633 = vpop.f32.mrb[0].mxu0
        %634 = vmatprep.mubr.bf16.mxu0 0
        %635 = vmatmul.mubr.bf16.gmra.mrb[0].mxu0 %v592
        %v636 = vpop.f32.mrb[0].mxu0
        %v637 = vadd.f32 %v578, %v636
        %v638 = vpop.f32.mrb[0].mxu0
        %v639 = vpop.f32.mrb[0].mxu0
        %v640 = vpop.f32.mrb[0].mxu0
        %641 = vdwg.mxu0
        %v642 = vmax.f32 %v629, 0.0
        %v643 = vmax.f32 %v632, 0.0
        %v644 = vmax.f32 %v637, 0.0
        %v645 = vld [vmem:[#allocation4] sm:$0xff]
        %v646 = vld [vmem:[#allocation4 + $0x8] sm:$0xff]
        %v647 = vpack.c.bf16 %v643, %v642
        %v648 = vpack.c.bf16 %v644, %v644
        %v651 = vunpack.c.l.b16 %v570
        %v652 = vunpack.c.l.b16 %v571
        %v653 = vpack.c.b16 %v652, %v651
        %vm654 = vcmask 195584
        %v656 = vsel %vm654, %v653, 0
        %vm658 = vcmask 1043456
        %v660 = vsel %vm658, %v648, 0
        %662 = vmatprep.subr.bf16.mxu0 0
        %663 = vmatpush1.bf16.msra.mxu0 %v647
        %664 = vmatprep.subr.bf16.mxu0 0
        %665 = vmatpush1.bf16.msra.mxu0 %v660
        %666 = vmatprep.subr.bf16.mxu0 0
        %667 = vmatpush1.bf16.msra.mxu0 0
        %668 = vmatprep.subr.bf16.mxu0 0
        %669 = vmatpush1.bf16.msra.mxu0 0
        %670 = vmatprep.subr.bf16.mxu0 0
        %671 = vmatpush1.bf16.msra.mxu0 0
        %672 = vmatprep.subr.bf16.mxu0 0
        %673 = vmatpush1.bf16.msra.mxu0 0
        %674 = vmatprep.subr.bf16.mxu0 0
        %675 = vmatpush1.bf16.msra.mxu0 0
        %676 = vmatprep.subr.bf16.mxu0 0
        %677 = vmatpush1.bf16.msra.mxu0 0
        %678 = vmatprep.subr.bf16.mxu0 0
        %679 = vmatpush1.bf16.msra.mxu0 0
        %680 = vmatprep.subr.bf16.mxu0 0
        %681 = vmatpush1.bf16.msra.mxu0 0
        %682 = vmatprep.subr.bf16.mxu0 0
        %683 = vmatpush1.bf16.msra.mxu0 0
        %684 = vmatprep.subr.bf16.mxu0 0
        %685 = vmatpush1.bf16.msra.mxu0 0
        %686 = vmatprep.subr.bf16.mxu0 0
        %687 = vmatpush1.bf16.msra.mxu0 0
        %688 = vmatprep.subr.bf16.mxu0 0
        %689 = vmatpush1.bf16.msra.mxu0 0
        %690 = vmatprep.subr.bf16.mxu0 0
        %691 = vmatpush1.bf16.msra.mxu0 0
        %692 = vmatprep.subr.bf16.mxu0 0
        %693 = vmatpush1.bf16.msra.mxu0 0
        %694 = vmatprep.mubr.bf16.mxu0 0
        %695 = vmatmul.mubr.bf16.gmra.mrb[0].mxu0 %v656
        %v696 = vpop.f32.mrb[0].mxu0
        %v697 = vadd.f32 0.0, %v696
        %v698 = vpop.f32.mrb[0].mxu0
        %v699 = vpop.f32.mrb[0].mxu0
        %v700 = vadd.f32 0.0, %v699
        %v701 = vpop.f32.mrb[0].mxu0
        %702 = vdwg.mxu0
        %v703 = vadd.f32 %v645, %v697
        %v704 = vadd.f32 %v646, %v700
        %705 = vst [vmem:[#allocation4] sm:$0xff] %v703
        %706 = vst [vmem:[#allocation4 + $0x8] sm:$0xff] %v704
        // Predicated region
        $region93: #{tpu_custom_call.1} parent=63 // pred_check
          %p707 = pneg %p546
        $region94: #{tpu_custom_call.1} parent=63 // pred_check_branch
          %709 = sbr.rel (%p707) target = $region96
        $region95: #{tpu_custom_call.1} parent=63 // pred_region
          %v710 = vld [vmem:[#allocation2] sm:$0xff]
          %v711 = vld [vmem:[#allocation2 + $0x8] sm:$0xff]
          %v712 = vld [vmem:[#allocation4] sm:$0xff]
          %v713 = vld [vmem:[#allocation4 + $0x8] sm:$0xff]
          %v714 = vadd.f32 %v710, %v712
          %v715 = vadd.f32 %v711, %v713
          %v716 = vpack.c.bf16 %v715, %v714
          %v717 = vld [vmem:[%s471] sm:$0xf]
          %v718 = vld [vmem:[%s471 + $0x4] sm:$0xf]
          %v719 = vld [vmem:[%s471 + $0x8] sm:$0xf]
          %v720 = vld [vmem:[%s471 + $0xc] sm:$0xf]
          %v721 = vld [vmem:[%s471 + $0x10] sm:$0xf]
          %v722 = vld [vmem:[%s471 + $0x14] sm:$0xf]
          %v723 = vld [vmem:[%s471 + $0x18] sm:$0xf]
          %v724 = vld [vmem:[%s471 + $0x1c] sm:$0xf]
          %v725 = vld [vmem:[%s471 + $0x20] sm:$0xf]
          %v726 = vld [vmem:[%s471 + $0x24] sm:$0xf]
          %v727 = vld [vmem:[%s471 + $0x28] sm:$0xf]
          %v728 = vld [vmem:[%s471 + $0x2c] sm:$0xf]
          %v729 = vld [vmem:[%s471 + $0x30] sm:$0xf]
          %v730 = vld [vmem:[%s471 + $0x34] sm:$0xf]
          %v731 = vld [vmem:[%s471 + $0x38] sm:$0xf]
          %v732 = vld [vmem:[%s471 + $0x3c] sm:$0xf]
          %v733 = vld [vmem:[%s543] sm:$0x1]
          %v735 = vlaneseq
          %v736 = vshrl.u32 %v735, 7
          %v737 = vsub.s32 0, %v736
          %v738 = vrot.slane %v733, %v737
          %v756 = vunpack.c.l.b16 %v717
          %v757 = vunpack.c.l.b16 %v718
          %v758 = vunpack.c.l.b16 %v719
          %v759 = vunpack.c.l.b16 %v720
          %v760 = vunpack.c.l.b16 %v721
          %v761 = vunpack.c.l.b16 %v722
          %v762 = vunpack.c.l.b16 %v723
          %v763 = vunpack.c.l.b16 %v724
          %v764 = vunpack.c.l.b16 %v725
          %v765 = vunpack.c.l.b16 %v726
          %v766 = vunpack.c.l.b16 %v727
          %v767 = vunpack.c.l.b16 %v728
          %v768 = vunpack.c.l.b16 %v729
          %v769 = vunpack.c.l.b16 %v730
          %v770 = vunpack.c.l.b16 %v731
          %v771 = vunpack.c.l.b16 %v732
          %v772 = vpack.c.b16 %v757, %v756
          %v773 = vpack.c.b16 %v759, %v758
          %v774 = vpack.c.b16 %v761, %v760
          %v775 = vpack.c.b16 %v763, %v762
          %v776 = vpack.c.b16 %v765, %v764
          %v777 = vpack.c.b16 %v767, %v766
          %v778 = vpack.c.b16 %v769, %v768
          %v779 = vpack.c.b16 %v771, %v770
          %788 = vmatprep.subr.bf16.mxu0 0
          %789 = vmatpush1.bf16.msra.mxu0 %v772
          %790 = vmatprep.subr.bf16.mxu0 0
          %791 = vmatpush1.bf16.msra.mxu0 %v773
          %792 = vmatprep.subr.bf16.mxu0 0
          %793 = vmatpush1.bf16.msra.mxu0 %v774
          %794 = vmatprep.subr.bf16.mxu0 0
          %795 = vmatpush1.bf16.msra.mxu0 %v775
          %796 = vmatprep.subr.bf16.mxu0 0
          %797 = vmatpush1.bf16.msra.mxu0 %v776
          %798 = vmatprep.subr.bf16.mxu0 0
          %799 = vmatpush1.bf16.msra.mxu0 %v777
          %800 = vmatprep.subr.bf16.mxu0 0
          %801 = vmatpush1.bf16.msra.mxu0 %v778
          %802 = vmatprep.subr.bf16.mxu0 0
          %803 = vmatpush1.bf16.msra.mxu0 %v779
          %804 = vmatprep.subr.bf16.mxu0 0
          %805 = vmatpush1.bf16.msra.mxu0 0
          %806 = vmatprep.subr.bf16.mxu0 0
          %807 = vmatpush1.bf16.msra.mxu0 0
          %808 = vmatprep.subr.bf16.mxu0 0
          %809 = vmatpush1.bf16.msra.mxu0 0
          %810 = vmatprep.subr.bf16.mxu0 0
          %811 = vmatpush1.bf16.msra.mxu0 0
          %812 = vmatprep.subr.bf16.mxu0 0
          %813 = vmatpush1.bf16.msra.mxu0 0
          %814 = vmatprep.subr.bf16.mxu0 0
          %815 = vmatpush1.bf16.msra.mxu0 0
          %816 = vmatprep.subr.bf16.mxu0 0
          %817 = vmatpush1.bf16.msra.mxu0 0
          %818 = vmatprep.subr.bf16.mxu0 0
          %819 = vmatpush1.bf16.msra.mxu0 0
          %820 = vmatprep.mubr.bf16.mxu0 0
          %821 = vmatmul.mubr.bf16.gmra.mrb[0].mxu0 %v716
          %v822 = vpop.f32.mrb[0].mxu0
          %v823 = vadd.f32 %v738, %v822
          %v824 = vpop.f32.mrb[0].mxu0
          %v825 = vpop.f32.mrb[0].mxu0
          %v826 = vadd.f32 %v738, %v825
          %v827 = vpop.f32.mrb[0].mxu0
          %828 = vdwg.mxu0
          %vm829 = vcmp.gt.f32.partialorder %v823, 0.0
          %vm830 = vcmp.gt.f32.partialorder %v826, 0.0
          %v831 = vmul.f32 %v823, 0.01
          %v832 = vmul.f32 %v826, 0.01
          %v833 = vsel %vm829, %v823, %v831
          %v834 = vsel %vm830, %v826, %v832
          %835 = vst [vmem:[#allocation2] sm:$0xff] %v833
          %836 = vst [vmem:[#allocation2 + $0x8] sm:$0xff] %v834
          %v837 = vpack.c.bf16 %v834, %v833
          %838 = vst [vmem:[#allocation3] sm:$0xff] %v837
        $region96: #{tpu_custom_call.1} parent=63 // pred_fallthru
          _
        %p839 = scmp.eq.s32.totalorder %s32, 2
        %p840 = pnand %p839, %p546
        %p841 = pneg %p840
        // Predicated region
        $region97: #{tpu_custom_call.1} parent=63 // pred_check
          _
        $region98: #{tpu_custom_call.1} parent=63 // pred_check_branch
          %843 = sbr.rel (%p840) target = $region100
        $region99: #{tpu_custom_call.1} parent=63 // pred_region
          %v844 = vld [vmem:[%s6] sm:$0xf]
          %v845 = vld [vmem:[#allocation3] sm:$0xff]
          %v847 = vsel %vm587, %v844, 0
          %849 = vmatprep.subr.bf16.mxu0 0
          %850 = vmatpush1.bf16.msra.mxu0 %v845
          %851 = vmatprep.subr.bf16.mxu0 0
          %852 = vmatpush1.bf16.msra.mxu0 0
          %853 = vmatprep.subr.bf16.mxu0 0
          %854 = vmatpush1.bf16.msra.mxu0 0
          %855 = vmatprep.subr.bf16.mxu0 0
          %856 = vmatpush1.bf16.msra.mxu0 0
          %857 = vmatprep.subr.bf16.mxu0 0
          %858 = vmatpush1.bf16.msra.mxu0 0
          %859 = vmatprep.subr.bf16.mxu0 0
          %860 = vmatpush1.bf16.msra.mxu0 0
          %861 = vmatprep.subr.bf16.mxu0 0
          %862 = vmatpush1.bf16.msra.mxu0 0
          %863 = vmatprep.subr.bf16.mxu0 0
          %864 = vmatpush1.bf16.msra.mxu0 0
          %865 = vmatprep.subr.bf16.mxu0 0
          %866 = vmatpush1.bf16.msra.mxu0 0
          %867 = vmatprep.subr.bf16.mxu0 0
          %868 = vmatpush1.bf16.msra.mxu0 0
          %869 = vmatprep.subr.bf16.mxu0 0
          %870 = vmatpush1.bf16.msra.mxu0 0
          %871 = vmatprep.subr.bf16.mxu0 0
          %872 = vmatpush1.bf16.msra.mxu0 0
          %873 = vmatprep.subr.bf16.mxu0 0
          %874 = vmatpush1.bf16.msra.mxu0 0
          %875 = vmatprep.subr.bf16.mxu0 0
          %876 = vmatpush1.bf16.msra.mxu0 0
          %877 = vmatprep.subr.bf16.mxu0 0
          %878 = vmatpush1.bf16.msra.mxu0 0
          %879 = vmatprep.subr.bf16.mxu0 0
          %880 = vmatpush1.bf16.msra.mxu0 0
          %881 = vmatprep.mubr.bf16.mxu0 0
          %882 = vmatmul.mubr.bf16.gmra.mrb[0].mxu0 %v847
          %v883 = vpop.f32.mrb[0].mxu0
          %v884 = vadd.f32 0.0, %v883
          %v885 = vpop.f32.mrb[0].mxu0
          %v886 = vpop.f32.mrb[0].mxu0
          %v887 = vpop.f32.mrb[0].mxu0
          %888 = vdwg.mxu0
          %v889 = vpack.c.bf16 %v884, %v884
          %v890 = vld [vmem:[#allocation11] sm:$0xff]
          %v891 = vld [vmem:[#allocation11 + $0x8] sm:$0xff]
          %v892 = vld [vmem:[#allocation11 + $0x10] sm:$0xff]
          %v893 = vld [vmem:[#allocation11 + $0x18] sm:$0xff]
          %v894 = vld [vmem:[#allocation11 + $0x20] sm:$0xff]
          %v895 = vld [vmem:[#allocation11 + $0x28] sm:$0xff]
          %v896 = vld [vmem:[#allocation11 + $0x30] sm:$0xff]
          %v897 = vld [vmem:[#allocation11 + $0x38] sm:$0xff]
          %v898 = vld [vmem:[#allocation11 + $0x40] sm:$0xff]
          %v899 = vld [vmem:[#allocation11 + $0x48] sm:$0xff]
          %v900 = vld [vmem:[#allocation11 + $0x50] sm:$0xff]
          %v901 = vld [vmem:[#allocation11 + $0x58] sm:$0xff]
          %v902 = vld [vmem:[#allocation11 + $0x60] sm:$0xff]
          %v903 = vld [vmem:[#allocation11 + $0x68] sm:$0xff]
          %v904 = vld [vmem:[#allocation11 + $0x70] sm:$0xff]
          %v905 = vld [vmem:[#allocation11 + $0x78] sm:$0xff]
          %v906 = vld [vmem:[%s8] sm:$0x3]
          %v908 = vlaneseq
          %v909 = vshrl.u32 %v908, 7
          %v910 = vsub.s32 0, %v909
          %v911 = vrot.slane %v906, %v910
          %v912 = vlaneseq
          %v913 = vshrl.u32 %v912, 7
          %v914 = vsub.s32 1, %v913
          %v915 = vrot.slane %v906, %v914
          %v934 = vunpack.c.l.b16 %v890
          %v935 = vunpack.c.h.b16 %v890
          %v936 = vunpack.c.l.b16 %v891
          %v937 = vunpack.c.h.b16 %v891
          %v938 = vunpack.c.l.b16 %v892
          %v939 = vunpack.c.h.b16 %v892
          %v940 = vunpack.c.l.b16 %v893
          %v941 = vunpack.c.h.b16 %v893
          %v942 = vunpack.c.l.b16 %v894
          %v943 = vunpack.c.h.b16 %v894
          %v944 = vunpack.c.l.b16 %v895
          %v945 = vunpack.c.h.b16 %v895
          %v946 = vunpack.c.l.b16 %v896
          %v947 = vunpack.c.h.b16 %v896
          %v948 = vunpack.c.l.b16 %v897
          %v949 = vunpack.c.h.b16 %v897
          %v950 = vunpack.c.l.b16 %v898
          %v951 = vunpack.c.h.b16 %v898
          %v952 = vunpack.c.l.b16 %v899
          %v953 = vunpack.c.h.b16 %v899
          %v954 = vunpack.c.l.b16 %v900
          %v955 = vunpack.c.h.b16 %v900
          %v956 = vunpack.c.l.b16 %v901
          %v957 = vunpack.c.h.b16 %v901
          %v958 = vunpack.c.l.b16 %v902
          %v959 = vunpack.c.h.b16 %v902
          %v960 = vunpack.c.l.b16 %v903
          %v961 = vunpack.c.h.b16 %v903
          %v962 = vunpack.c.l.b16 %v904
          %v963 = vunpack.c.h.b16 %v904
          %v964 = vunpack.c.l.b16 %v905
          %v965 = vunpack.c.h.b16 %v905
          %v966 = vpack.c.b16 %v936, %v934
          %v967 = vpack.c.b16 %v937, %v935
          %v968 = vpack.c.b16 %v940, %v938
          %v969 = vpack.c.b16 %v941, %v939
          %v970 = vpack.c.b16 %v944, %v942
          %v971 = vpack.c.b16 %v945, %v943
          %v972 = vpack.c.b16 %v948, %v946
          %v973 = vpack.c.b16 %v949, %v947
          %v974 = vpack.c.b16 %v952, %v950
          %v975 = vpack.c.b16 %v953, %v951
          %v976 = vpack.c.b16 %v956, %v954
          %v977 = vpack.c.b16 %v957, %v955
          %v978 = vpack.c.b16 %v960, %v958
          %v979 = vpack.c.b16 %v961, %v959
          %v980 = vpack.c.b16 %v964, %v962
          %v981 = vpack.c.b16 %v965, %v963
          %998 = vmatprep.subr.bf16.mxu0 %v967
          %999 = vmatpush1.bf16.msra.mxu0 %v966
          %1000 = vmatprep.subr.bf16.mxu0 %v969
          %1001 = vmatpush1.bf16.msra.mxu0 %v968
          %1002 = vmatprep.subr.bf16.mxu0 %v971
          %1003 = vmatpush1.bf16.msra.mxu0 %v970
          %1004 = vmatprep.subr.bf16.mxu0 %v973
          %1005 = vmatpush1.bf16.msra.mxu0 %v972
          %1006 = vmatprep.subr.bf16.mxu0 %v975
          %1007 = vmatpush1.bf16.msra.mxu0 %v974
          %1008 = vmatprep.subr.bf16.mxu0 %v977
          %1009 = vmatpush1.bf16.msra.mxu0 %v976
          %1010 = vmatprep.subr.bf16.mxu0 %v979
          %1011 = vmatpush1.bf16.msra.mxu0 %v978
          %1012 = vmatprep.subr.bf16.mxu0 %v981
          %1013 = vmatpush1.bf16.msra.mxu0 %v980
          %1014 = vmatprep.subr.bf16.mxu0 0
          %1015 = vmatpush1.bf16.msra.mxu0 0
          %1016 = vmatprep.subr.bf16.mxu0 0
          %1017 = vmatpush1.bf16.msra.mxu0 0
          %1018 = vmatprep.subr.bf16.mxu0 0
          %1019 = vmatpush1.bf16.msra.mxu0 0
          %1020 = vmatprep.subr.bf16.mxu0 0
          %1021 = vmatpush1.bf16.msra.mxu0 0
          %1022 = vmatprep.subr.bf16.mxu0 0
          %1023 = vmatpush1.bf16.msra.mxu0 0
          %1024 = vmatprep.subr.bf16.mxu0 0
          %1025 = vmatpush1.bf16.msra.mxu0 0
          %1026 = vmatprep.subr.bf16.mxu0 0
          %1027 = vmatpush1.bf16.msra.mxu0 0
          %1028 = vmatprep.subr.bf16.mxu0 0
          %1029 = vmatpush1.bf16.msra.mxu0 0
          %1030 = vmatprep.mubr.bf16.mxu0 0
          %1031 = vmatmul.mubr.bf16.gmra.mrb[0].mxu0 %v889
          %v1032 = vpop.f32.mrb[0].mxu0
          %v1033 = vadd.f32 %v911, %v1032
          %v1034 = vpop.f32.mrb[0].mxu0
          %v1035 = vadd.f32 %v915, %v1034
          %v1036 = vpop.f32.mrb[0].mxu0
          %v1037 = vpop.f32.mrb[0].mxu0
          %1038 = vdwg.mxu0
          %vm1039 = vcmp.gt.f32.partialorder %v1033, 0.0
          %vm1040 = vcmp.gt.f32.partialorder %v1035, 0.0
          %v1041 = vmul.f32 %v1033, 0.01
          %v1042 = vmul.f32 %v1035, 0.01
          %v1043 = vsel %vm1039, %v1033, %v1041
          %v1044 = vsel %vm1040, %v1035, %v1042
          %v1045 = vpack.c.bf16 %v1043, %v1043
          %v1046 = vpack.c.bf16 %v1044, %v1044
          %v1047 = vld [vmem:[#allocation13] sm:$0xf]
          %v1048 = vld [vmem:[#allocation13 + $0x4] sm:$0xf]
          %v1049 = vld [vmem:[#allocation13 + $0x8] sm:$0xf]
          %v1050 = vld [vmem:[#allocation13 + $0xc] sm:$0xf]
          %v1051 = vld [vmem:[#allocation13 + $0x10] sm:$0xf]
          %v1052 = vld [vmem:[#allocation13 + $0x14] sm:$0xf]
          %v1053 = vld [vmem:[#allocation13 + $0x18] sm:$0xf]
          %v1054 = vld [vmem:[#allocation13 + $0x1c] sm:$0xf]
          %v1055 = vld [vmem:[#allocation13 + $0x20] sm:$0xf]
          %v1056 = vld [vmem:[#allocation13 + $0x24] sm:$0xf]
          %v1057 = vld [vmem:[#allocation13 + $0x28] sm:$0xf]
          %v1058 = vld [vmem:[#allocation13 + $0x2c] sm:$0xf]
          %v1059 = vld [vmem:[#allocation13 + $0x30] sm:$0xf]
          %v1060 = vld [vmem:[#allocation13 + $0x34] sm:$0xf]
          %v1061 = vld [vmem:[#allocation13 + $0x38] sm:$0xf]
          %v1062 = vld [vmem:[#allocation13 + $0x3c] sm:$0xf]
          %v1063 = vld [vmem:[#allocation13 + $0x40] sm:$0xf]
          %v1064 = vld [vmem:[#allocation13 + $0x44] sm:$0xf]
          %v1065 = vld [vmem:[#allocation13 + $0x48] sm:$0xf]
          %v1066 = vld [vmem:[#allocation13 + $0x4c] sm:$0xf]
          %v1067 = vld [vmem:[#allocation13 + $0x50] sm:$0xf]
          %v1068 = vld [vmem:[#allocation13 + $0x54] sm:$0xf]
          %v1069 = vld [vmem:[#allocation13 + $0x58] sm:$0xf]
          %v1070 = vld [vmem:[#allocation13 + $0x5c] sm:$0xf]
          %v1071 = vld [vmem:[#allocation13 + $0x60] sm:$0xf]
          %v1072 = vld [vmem:[#allocation13 + $0x64] sm:$0xf]
          %v1073 = vld [vmem:[#allocation13 + $0x68] sm:$0xf]
          %v1074 = vld [vmem:[#allocation13 + $0x6c] sm:$0xf]
          %v1075 = vld [vmem:[#allocation13 + $0x70] sm:$0xf]
          %v1076 = vld [vmem:[#allocation13 + $0x74] sm:$0xf]
          %v1077 = vld [vmem:[#allocation13 + $0x78] sm:$0xf]
          %v1078 = vld [vmem:[#allocation13 + $0x7c] sm:$0xf]
          %v1079 = vld [vmem:[%s10] sm:$0x1]
          %v1081 = vlaneseq
          %v1082 = vshrl.u32 %v1081, 7
          %v1083 = vsub.s32 0, %v1082
          %v1084 = vrot.slane %v1079, %v1083
          %v1118 = vunpack.c.l.b16 %v1047
          %v1119 = vunpack.c.l.b16 %v1048
          %v1120 = vunpack.c.l.b16 %v1049
          %v1121 = vunpack.c.l.b16 %v1050
          %v1122 = vunpack.c.l.b16 %v1051
          %v1123 = vunpack.c.l.b16 %v1052
          %v1124 = vunpack.c.l.b16 %v1053
          %v1125 = vunpack.c.l.b16 %v1054
          %v1126 = vunpack.c.l.b16 %v1055
          %v1127 = vunpack.c.l.b16 %v1056
          %v1128 = vunpack.c.l.b16 %v1057
          %v1129 = vunpack.c.l.b16 %v1058
          %v1130 = vunpack.c.l.b16 %v1059
          %v1131 = vunpack.c.l.b16 %v1060
          %v1132 = vunpack.c.l.b16 %v1061
          %v1133 = vunpack.c.l.b16 %v1062
          %v1134 = vunpack.c.l.b16 %v1063
          %v1135 = vunpack.c.l.b16 %v1064
          %v1136 = vunpack.c.l.b16 %v1065
          %v1137 = vunpack.c.l.b16 %v1066
          %v1138 = vunpack.c.l.b16 %v1067
          %v1139 = vunpack.c.l.b16 %v1068
          %v1140 = vunpack.c.l.b16 %v1069
          %v1141 = vunpack.c.l.b16 %v1070
          %v1142 = vunpack.c.l.b16 %v1071
          %v1143 = vunpack.c.l.b16 %v1072
          %v1144 = vunpack.c.l.b16 %v1073
          %v1145 = vunpack.c.l.b16 %v1074
          %v1146 = vunpack.c.l.b16 %v1075
          %v1147 = vunpack.c.l.b16 %v1076
          %v1148 = vunpack.c.l.b16 %v1077
          %v1149 = vunpack.c.l.b16 %v1078
          %v1150 = vpack.c.b16 %v1119, %v1118
          %v1151 = vpack.c.b16 %v1121, %v1120
          %v1152 = vpack.c.b16 %v1123, %v1122
          %v1153 = vpack.c.b16 %v1125, %v1124
          %v1154 = vpack.c.b16 %v1127, %v1126
          %v1155 = vpack.c.b16 %v1129, %v1128
          %v1156 = vpack.c.b16 %v1131, %v1130
          %v1157 = vpack.c.b16 %v1133, %v1132
          %v1158 = vpack.c.b16 %v1135, %v1134
          %v1159 = vpack.c.b16 %v1137, %v1136
          %v1160 = vpack.c.b16 %v1139, %v1138
          %v1161 = vpack.c.b16 %v1141, %v1140
          %v1162 = vpack.c.b16 %v1143, %v1142
          %v1163 = vpack.c.b16 %v1145, %v1144
          %v1164 = vpack.c.b16 %v1147, %v1146
          %v1165 = vpack.c.b16 %v1149, %v1148
          %1182 = vmatprep.subr.bf16.mxu0 0
          %1183 = vmatpush1.bf16.msra.mxu0 %v1150
          %1184 = vmatprep.subr.bf16.mxu0 0
          %1185 = vmatpush1.bf16.msra.mxu0 %v1151
          %1186 = vmatprep.subr.bf16.mxu0 0
          %1187 = vmatpush1.bf16.msra.mxu0 %v1152
          %1188 = vmatprep.subr.bf16.mxu0 0
          %1189 = vmatpush1.bf16.msra.mxu0 %v1153
          %1190 = vmatprep.subr.bf16.mxu0 0
          %1191 = vmatpush1.bf16.msra.mxu0 %v1154
          %1192 = vmatprep.subr.bf16.mxu0 0
          %1193 = vmatpush1.bf16.msra.mxu0 %v1155
          %1194 = vmatprep.subr.bf16.mxu0 0
          %1195 = vmatpush1.bf16.msra.mxu0 %v1156
          %1196 = vmatprep.subr.bf16.mxu0 0
          %1197 = vmatpush1.bf16.msra.mxu0 %v1157
          %1198 = vmatprep.subr.bf16.mxu0 0
          %1199 = vmatpush1.bf16.msra.mxu0 %v1158
          %1200 = vmatprep.subr.bf16.mxu0 0
          %1201 = vmatpush1.bf16.msra.mxu0 %v1159
          %1202 = vmatprep.subr.bf16.mxu0 0
          %1203 = vmatpush1.bf16.msra.mxu0 %v1160
          %1204 = vmatprep.subr.bf16.mxu0 0
          %1205 = vmatpush1.bf16.msra.mxu0 %v1161
          %1206 = vmatprep.subr.bf16.mxu0 0
          %1207 = vmatpush1.bf16.msra.mxu0 %v1162
          %1208 = vmatprep.subr.bf16.mxu0 0
          %1209 = vmatpush1.bf16.msra.mxu0 %v1163
          %1210 = vmatprep.subr.bf16.mxu0 0
          %1211 = vmatpush1.bf16.msra.mxu0 %v1164
          %1212 = vmatprep.subr.bf16.mxu0 0
          %1213 = vmatpush1.bf16.msra.mxu0 %v1165
          %1214 = vmatprep.mubr.bf16.mxu0 %v1046
          %1215 = vmatmul.mubr.bf16.gmra.mrb[0].mxu0 %v1045
          %v1216 = vpop.f32.mrb[0].mxu0
          %v1217 = vadd.f32 %v1084, %v1216
          %v1218 = vpop.f32.mrb[0].mxu0
          %v1219 = vpop.f32.mrb[0].mxu0
          %v1220 = vpop.f32.mrb[0].mxu0
          %1221 = vdwg.mxu0
          %1222 = vst [vmem:[#allocation14] sm:$0xff] %v1217
        $region100: #{tpu_custom_call.1} parent=63 // pred_fallthru
          _
        // Predicated region
        $region101: #{tpu_custom_call.1} parent=63 // pred_check
          %p1223 = pneg %p311
        $region102: #{tpu_custom_call.1} parent=63 // pred_check_branch
          %1225 = sbr.rel (%p1223) target = $region104
        $region103: #{tpu_custom_call.1} parent=63 // pred_region
          %s1227 = ssub.s32 128, 128
          %1228 = vsyncadd [#allocation7], %s1227
          %s1230 = sshll.u32 [#allocation14], 4
          %s1231 = int_to_ptr.vmem [resolvable:$true] %s1230
          %1233 = dma.vmem_to_hbm [thread:$0]  %s1231, 128, %s11, [#allocation7]
        $region104: #{tpu_custom_call.1} parent=63 // pred_fallthru
          _
        // Predicated region
        $region105: #{tpu_custom_call.1} parent=63 // pred_check
          %p1234 = pneg %p311
        $region106: #{tpu_custom_call.1} parent=63 // pred_check_branch
          %1236 = sbr.rel (%p1234) target = $region108
        $region107: #{tpu_custom_call.1} parent=63 // pred_region
          %1237 = dma.done [#allocation7], 128
        $region108: #{tpu_custom_call.1} parent=63 // pred_fallthru
          _
      $region64: #{tpu_custom_call.1} parent=5 // pred_fallthru
        _
      %p1238 = scmp.le.s32.totalorder 2, %s23
      // Predicated region
      $region109: #{tpu_custom_call.1} parent=5 // pred_check
        %p1239 = pneg %p1238
      $region110: #{tpu_custom_call.1} parent=5 // pred_check_branch
        %1241 = sbr.rel (%p1239) target = $region112
      $region111: #{tpu_custom_call.1} parent=5 // pred_region
        %s1242 = ssub.s32 %s23, 2
      $region112: #{tpu_custom_call.1} parent=5 // pred_fallthru
        _
    $region6: #{tpu_custom_call.1} parent=1 // loop_footer
      %s27 = sadd.s32 1, %s23
    $region7: #{tpu_custom_call.1} parent=1 // loop_footer_branch
      %22 = sbr.rel target = $region3
    $region8: #{tpu_custom_call.1} parent=1 // loop_exit
      _
    %1243 = vsyncpa [#allocation6], 1
    %s1244 = scalar_lea.sflag [#allocation6], 1
    %1245 = vsyncpa %s1244, 1
    %1246 = vsyncpa [#allocation9], 1
    %s1247 = scalar_lea.sflag [#allocation9], 1
    %1248 = vsyncpa %s1247, 1
    %1249 = vsyncpa [#allocation12], 1
    %1250 = vsyncpa [#allocation7], 1
    %s1251 = scalar_lea.sflag [#allocation7], 1
    %1252 = vsyncpa %s1251, 1

</llo_original>
